<compile_context>
chip_gen: v5e
topology: v5e:2x2
jax: 0.10.0
libtpu: 0.0.40
codegen_flags: <defaults>
</compile_context>

<pallas_src>
import functools
import numpy as np
import jax
import jax.numpy as jnp
from jax.experimental import pallas as pl
from jax.experimental.pallas import tpu as pltpu


# --------------------------- per-generation config ---------------------------

_ATTN_TILE = 256          # target query / key-value tile for attention


@functools.lru_cache(maxsize=None)
def _chip_config():
    """Per-TPU-generation tiling / VMEM budget (queried once at trace time)."""
    vmem_bytes = None
    try:
        vmem_bytes = int(pltpu.get_tpu_info().vmem_capacity_bytes)
    except Exception:
        vmem_bytes = None
    if vmem_bytes is not None and vmem_bytes >= 96 * 1024 * 1024:
        # v5e / v6e: 128 MiB physical VMEM -> bigger tiles, generous limit.
        return {"vmem_limit": 100 * 1024 * 1024, "tm": 512,
                "tn_cap": 2048, "tk_cap": 2048}
    # v7x (64 MiB physical) or unknown chip: leave headroom for Mosaic.
    return {"vmem_limit": 52 * 1024 * 1024, "tm": 256,
            "tn_cap": 1024, "tk_cap": 1024}


def _row_tile(m, target):
    """Largest multiple-of-8 row tile <= target that divides m (or full m)."""
    if m <= target:
        return m
    c = (target // 8) * 8
    while c >= 8:
        if m % c == 0:
            return c
        c -= 8
    return m          # odd m: full block (legal; callers keep B*T a multiple of 8)


def _col_tile(n, cap):
    """Largest multiple-of-128 tile <= cap that divides n, else the full dim."""
    c = (min(n, cap) // 128) * 128
    while c >= 128:
        if n % c == 0:
            return c
        c -= 128
    return n


# ------------------------------ exact GELU ---------------------------------

_A1, _A2, _A3, _A4, _A5 = 0.254829592, -0.284496736, 1.421413741, -1.453152027, 1.061405429
_P = 0.3275911
_SQRT1_2 = 0.7071067811865476


def _gelu_exact(x):
    # torch.nn.GELU() (erf form).  erf uses the Abramowitz & Stegun 7.1.26
    # rational approximation (|err| <= 1.5e-7); the divide is an approx EUP
    # reciprocal, which is far below bf16 output precision.
    z = x * _SQRT1_2
    sgn = jnp.where(z < 0.0, -1.0, 1.0)
    a = jnp.abs(z)
    t = pl.reciprocal(1.0 + _P * a, approx=True)
    poly = ((((_A5 * t + _A4) * t + _A3) * t + _A2) * t + _A1) * t
    erf = sgn * (1.0 - poly * jnp.exp(-a * a))
    return 0.5 * x * (1.0 + erf)


# ----------------------- fused LayerNorm -> matmul --------------------------

def _ln_matmul_kernel(x_ref, lnw_ref, lnb_ref, w_ref, b_ref, o_ref, xn_ref, *, gelu):
    # Grid is (M//tm, Np//tn); j is the (arbitrary) N axis.  LayerNorm of the
    # current row tile is computed once (j == 0), cached in a bf16 VMEM scratch
    # and reused for every N tile of the weight.
    j = pl.program_id(1)

    @pl.when(j == 0)
    def _():
        x = x_ref[...].astype(jnp.float32)
        mu = jnp.mean(x, axis=-1, keepdims=True)
        xc = x - mu
        var = jnp.mean(xc * xc, axis=-1, keepdims=True)        # biased, like torch
        inv = jax.lax.rsqrt(var + 1e-5)                        # eps = 1e-5
        xn = xc * inv * lnw_ref[...] + lnb_ref[...]
        xn_ref[...] = xn.astype(xn_ref.dtype)                  # bf16 for the MXU

    acc = jnp.dot(xn_ref[...], w_ref[...], preferred_element_type=jnp.float32)
    acc = acc + b_ref[...]
    if gelu:
        acc = _gelu_exact(acc)
    o_ref[...] = acc.astype(o_ref.dtype)


def ln_matmul(x, ln_w, ln_b, w, b, *, gelu, out_dtype):
    """out = [gelu](LayerNorm(x) @ w + b).  x:(M,K) f32, w:(K,N) bf16, b:(N,) f32."""
    M, K = x.shape
    K2, N = w.shape
    assert K == K2
    cfg = _chip_config()
    tm = _row_tile(M, cfg["tm"])

    # Pick the N tile; zero-pad N when it must be tiled but has no multiple-of
    # -128 divisor (e.g. a 50257-entry vocab head) so blocks stay lane-dense.
    Np, w_p, b_p = N, w, b
    if N <= cfg["tn_cap"]:
        tn = N
    else:
        tn = _col_tile(N, cfg["tn_cap"])
        if tn == N:                                   # no divisor -> pad
            tn = max(128, min(512, cfg["tn_cap"]))
            Np = ((N + tn - 1) // tn) * tn
            w_p = jnp.pad(w, ((0, 0), (0, Np - N)))
            b_p = jnp.pad(b, ((0, Np - N),))

    w_kwargs = {"pipeline_mode": pl.Buffered(3)} if (Np // tn) >= 3 else {}
    kern = functools.partial(_ln_matmul_kernel, gelu=gelu)
    out = pl.pallas_call(
        kern,
        out_shape=jax.ShapeDtypeStruct((M, Np), out_dtype),
        grid=(M // tm, Np // tn),
        in_specs=[
            pl.BlockSpec((tm, K), lambda i, j: (i, 0)),
            pl.BlockSpec((1, K), lambda i, j: (0, 0)),
            pl.BlockSpec((1, K), lambda i, j: (0, 0)),
            pl.BlockSpec((K, tn), lambda i, j: (0, j), **w_kwargs),
            pl.BlockSpec((1, tn), lambda i, j: (0, j)),
        ],
        out_specs=pl.BlockSpec((tm, tn), lambda i, j: (i, j)),
        scratch_shapes=[pltpu.VMEM((tm, K), jnp.bfloat16)],
        compiler_params=pltpu.CompilerParams(
            dimension_semantics=("parallel", "arbitrary"),
            vmem_limit_bytes=cfg["vmem_limit"]),
    )(x, ln_w.reshape(1, K), ln_b.reshape(1, K), w_p, b_p.reshape(1, Np))
    return out if Np == N else out[:, :N]


# ---------------- K/N-tiled matmul + bias + residual add --------------------

def _matmul_res_kernel(x_ref, w_ref, b_ref, res_ref, o_ref, acc_ref):
    k = pl.program_id(2)

    @pl.when(k == 0)
    def _():
        acc_ref[...] = jnp.zeros_like(acc_ref)

    acc_ref[...] += jnp.dot(x_ref[...], w_ref[...], preferred_element_type=jnp.float32)

    @pl.when(k == pl.num_programs(2) - 1)
    def _():
        o_ref[...] = (acc_ref[...] + b_ref[...] + res_ref[...]).astype(o_ref.dtype)


def linear_residual(x, w, b, res):
    """out = res + x @ w + b.  x:(M,K) bf16, w:(K,N) bf16, b:(N,)/res:(M,N) f32."""
    M, K = x.shape
    K2, N = w.shape
    assert K == K2 and res.shape == (M, N)
    cfg = _chip_config()
    tm = _row_tile(M, cfg["tm"])
    # N == dim at both call sites: keep the full output row resident so the
    # activation strip is streamed from HBM exactly once per row tile.
    tn = N if N <= cfg["tn_cap"] else _col_tile(N, cfg["tn_cap"])
    tk = K if K <= cfg["tk_cap"] else _col_tile(K, cfg["tk_cap"])
    w_kwargs = ({"pipeline_mode": pl.Buffered(3)}
                if (N // tn) * (K // tk) >= 3 else {})
    return pl.pallas_call(
        _matmul_res_kernel,
        out_shape=jax.ShapeDtypeStruct((M, N), jnp.float32),
        grid=(M // tm, N // tn, K // tk),
        in_specs=[
            pl.BlockSpec((tm, tk), lambda i, j, k: (i, k)),
            pl.BlockSpec((tk, tn), lambda i, j, k: (k, j), **w_kwargs),
            pl.BlockSpec((1, tn), lambda i, j, k: (0, j)),
            pl.BlockSpec((tm, tn), lambda i, j, k: (i, j)),
        ],
        out_specs=pl.BlockSpec((tm, tn), lambda i, j, k: (i, j)),
        scratch_shapes=[pltpu.VMEM((tm, tn), jnp.float32)],
        compiler_params=pltpu.CompilerParams(
            dimension_semantics=("parallel", "parallel", "arbitrary"),
            vmem_limit_bytes=cfg["vmem_limit"]),
    )(x, w, b.reshape(1, N), res)


# -------------------------- flash-style attention ---------------------------

def _attn_init(m_sc, l_sc, acc_sc):
    m_sc[...] = jnp.full_like(m_sc, -1e30)
    l_sc[...] = jnp.zeros_like(l_sc)
    acc_sc[...] = jnp.zeros_like(acc_sc)


def _online_softmax_step(scores, v, m_sc, l_sc, acc_sc):
    m_prev = m_sc[...]
    m_new = jnp.maximum(m_prev, jnp.max(scores, axis=-1, keepdims=True))
    alpha = jnp.exp(m_prev - m_new)
    p = jnp.exp(scores - m_new)
    l_sc[...] = alpha * l_sc[...] + jnp.sum(p, axis=-1, keepdims=True)
    acc_sc[...] = alpha * acc_sc[...] + jnp.dot(
        p.astype(v.dtype), v, preferred_element_type=jnp.float32)
    m_sc[...] = m_new


def _attn_finalize(o_ref, l_sc, acc_sc):
    o_ref[0] = (acc_sc[...] * pl.reciprocal(l_sc[...], approx=True)
                ).astype(o_ref.dtype)


def _attn_dense_kernel(q_ref, k_ref, v_ref, o_ref, m_sc, l_sc, acc_sc):
    ki = pl.program_id(2)

    @pl.when(ki == 0)
    def _():
        _attn_init(m_sc, l_sc, acc_sc)

    # The softmax 1/sqrt(dh) scale is pre-folded into the Q projection weights.
    scores = jax.lax.dot_general(q_ref[0], k_ref[0], (((1,), (1,)), ((), ())),
                                 preferred_element_type=jnp.float32)
    _online_softmax_step(scores, v_ref[0], m_sc, l_sc, acc_sc)

    @pl.when(ki == pl.num_programs(2) - 1)
    def _():
        _attn_finalize(o_ref, l_sc, acc_sc)


def _attn_fenwick_kernel(kv_ids_ref, kv_cnt_ref, q_ref, k_ref, v_ref, o_ref,
                         m_sc, l_sc, acc_sc, *, tq, tkv, max_kv):
    qi = pl.program_id(1)
    s = pl.program_id(2)
    count = kv_cnt_ref[qi]

    @pl.when(s == 0)
    def _():
        _attn_init(m_sc, l_sc, acc_sc)

    @pl.when(s < count)                    # padded table slots skipped entirely
    def _():
        ki = kv_ids_ref[qi * max_kv + s]
        scores = jax.lax.dot_general(q_ref[0], k_ref[0], (((1,), (1,)), ((), ())),
                                     preferred_element_type=jnp.float32)
        # Fenwick mask generated in-kernel (no T*T HBM bias): key j is visible
        # to query i iff d = i - j is 0 or a positive power of two.
        row = qi * tq + jax.lax.broadcasted_iota(jnp.int32, (tq, tkv), 0)
        col = ki * tkv + jax.lax.broadcasted_iota(jnp.int32, (tq, tkv), 1)
        d = row - col
        visible = (d == 0) | ((d > 0) & ((d & (d - 1)) == 0))
        scores = jnp.where(visible, scores, -1e30)
        _online_softmax_step(scores, v_ref[0], m_sc, l_sc, acc_sc)

    @pl.when(s == count - 1)
    def _():
        _attn_finalize(o_ref, l_sc, acc_sc)


def _attn_tiles(T):
    t = _row_tile(T, _ATTN_TILE)
    return t, t


def fenwick_kv_tables(T):
    """Per-query-block list of KV blocks that contain >= 1 visible Fenwick key.

    Element-level mask (== create_fenwick_mask * tril): key j visible to query
    i iff i - j == 0 or i - j is a positive power of two, so only O(log T) KV
    blocks per query block are active.  Padded slots repeat the last real
    block index so they incur no extra DMA (compute is gated off in-kernel).
    """
    tq, tkv = _attn_tiles(T)
    nq, nk = T // tq, T // tkv
    offsets = [0] + [1 << k for k in range(int(T).bit_length()) if (1 << k) < T]
    blk = np.zeros((nq, nk), dtype=bool)
    for qi in range(nq):
        i_lo, i_hi = qi * tq, qi * tq + tq - 1
        for d in offsets:
            j_hi = i_hi - d
            if j_hi < 0:
                continue
            j_lo = max(0, i_lo - d)
            blk[qi, j_lo // tkv: j_hi // tkv + 1] = True
    counts = blk.sum(axis=1).astype(np.int32)
    max_kv = int(counts.max())
    ids = np.zeros((nq, max_kv), dtype=np.int32)
    for qi in range(nq):
        act = np.flatnonzero(blk[qi]).astype(np.int32)
        ids[qi, :act.size] = act
        ids[qi, act.size:] = act[-1]
    return jnp.asarray(ids), jnp.asarray(counts)


def attention(qkv, B, T, heads, fenwick_tables=None):
    """Flash attention over fused (B*T, 3D) QKV; heads live in the grid.

    Unmasked layers (nn.MultiheadAttention) do a dense KV sweep; Fenwick layers
    only visit the KV blocks listed in `fenwick_tables`.  Returns (B*T, D) bf16.
    """
    M, three_d = qkv.shape
    D = three_d // 3
    dh = D // heads
    BH = B * heads
    cfg = _chip_config()
    tq, tkv = _attn_tiles(T)
    nq, nk = T // tq, T // tkv

    # One fused XLA relayout in: (B*T, 3D) -> (3*B*H, T, dh).  dh < 128, so
    # head slicing cannot be a lane-dense in-kernel BlockSpec.
    qkv_t = qkv.reshape(B, T, 3, heads, dh).transpose(2, 0, 3, 1, 4)
    qkv_t = qkv_t.reshape(3 * BH, T, dh)

    scratch = [pltpu.VMEM((tq, 1), jnp.float32),     # running max m
               pltpu.VMEM((tq, 1), jnp.float32),     # running denominator l
               pltpu.VMEM((tq, dh), jnp.float32)]    # output accumulator
    out_shape = jax.ShapeDtypeStruct((BH, T, dh), jnp.bfloat16)
    cparams = pltpu.CompilerParams(
        dimension_semantics=("parallel", "parallel", "arbitrary"),
        vmem_limit_bytes=cfg["vmem_limit"])

    if fenwick_tables is None:
        kv_kwargs = {"pipeline_mode": pl.Buffered(3)} if nk >= 3 else {}
        o = pl.pallas_call(
            _attn_dense_kernel,
            out_shape=out_shape,
            grid=(BH, nq, nk),
            in_specs=[
                pl.BlockSpec((1, tq, dh), lambda b, qi, ki: (b, qi, 0)),
                pl.BlockSpec((1, tkv, dh), lambda b, qi, ki: (BH + b, ki, 0),
                             **kv_kwargs),
                pl.BlockSpec((1, tkv, dh), lambda b, qi, ki: (2 * BH + b, ki, 0),
                             **kv_kwargs),
            ],
            out_specs=pl.BlockSpec((1, tq, dh), lambda b, qi, ki: (b, qi, 0)),
            scratch_shapes=scratch,
            compiler_params=cparams,
        )(qkv_t, qkv_t, qkv_t)
    else:
        kv_ids, kv_counts = fenwick_tables
        assert kv_ids.shape[0] == nq and kv_counts.shape == (nq,)
        max_kv = kv_ids.shape[1]
        kv_ids_flat = kv_ids.reshape(-1)
        kern = functools.partial(_attn_fenwick_kernel, tq=tq, tkv=tkv, max_kv=max_kv)
        grid_spec = pltpu.PrefetchScalarGridSpec(
            num_scalar_prefetch=2,
            grid=(BH, nq, max_kv),
            in_specs=[
                pl.BlockSpec((1, tq, dh),
                             lambda b, qi, s, ids, cnt: (b, qi, 0)),
                pl.BlockSpec((1, tkv, dh),
                             lambda b, qi, s, ids, cnt: (BH + b, ids[qi * max_kv + s], 0)),
                pl.BlockSpec((1, tkv, dh),
                             lambda b, qi, s, ids, cnt: (2 * BH + b, ids[qi * max_kv + s], 0)),
            ],
            out_specs=pl.BlockSpec((1, tq, dh),
                                   lambda b, qi, s, ids, cnt: (b, qi, 0)),
            scratch_shapes=scratch,
        )
        o = pl.pallas_call(kern, out_shape=out_shape, grid_spec=grid_spec,
                           compiler_params=cparams)(
            kv_ids_flat, kv_counts, qkv_t, qkv_t, qkv_t)

    # One fused XLA relayout out: (B*H, T, dh) -> (B*T, D), lane-dense for proj.
    return o.reshape(B, heads, T, dh).transpose(0, 2, 1, 3).reshape(M, D)


# ------------------------------ model glue ----------------------------------

def init_params(key, vocab, dim, depth, heads, max_seq_len):
    keys = jax.random.split(key, 4 + depth)
    scale = float(dim // heads) ** -0.5

    def w(k, shape):   # matmul weights in bf16 (MXU inputs, half the HBM traffic)
        return (jax.random.normal(k, shape, jnp.float32) * 0.02).astype(jnp.bfloat16)

    p = {
        "tok": jax.random.normal(keys[0], (vocab, dim), jnp.float32) * 0.02,
        "pos": jax.random.normal(keys[1], (1, max_seq_len, dim), jnp.float32) * 0.02,
        "head_w": w(keys[2], (dim, vocab)),
        "head_b": jnp.zeros((vocab,), jnp.float32),
        "fn_w": jnp.ones((dim,), jnp.float32),
        "fn_b": jnp.zeros((dim,), jnp.float32),
        "layers": [],
    }
    for i in range(depth):
        lk = jax.random.split(keys[4 + i], 4)
        # Fold the softmax 1/sqrt(dh) scale into the Q projection (weights; the
        # bias is zero so the fold is a no-op there) -> attention never
        # rescales q per KV step.
        qkv_w = jax.random.normal(lk[0], (dim, 3 * dim), jnp.float32) * 0.02
        qkv_w = qkv_w.at[:, :dim].multiply(scale)
        p["layers"].append(dict(
            ln1_w=jnp.ones((dim,), jnp.float32), ln1_b=jnp.zeros((dim,), jnp.float32),
            ln2_w=jnp.ones((dim,), jnp.float32), ln2_b=jnp.zeros((dim,), jnp.float32),
            qkv_w=qkv_w.astype(jnp.bfloat16), qkv_b=jnp.zeros((3 * dim,), jnp.float32),
            proj_w=w(lk[1], (dim, dim)), proj_b=jnp.zeros((dim,), jnp.float32),
            mlp_w1=w(lk[2], (dim, 4 * dim)), mlp_b1=jnp.zeros((4 * dim,), jnp.float32),
            mlp_w2=w(lk[3], (4 * dim, dim)), mlp_b2=jnp.zeros((dim,), jnp.float32),
        ))
    return p


def forward(tokens, params, fenwick_kv_ids, fenwick_kv_counts, *, dim, heads):
    """AdvancedVideoTransformer.forward (eval mode: dropout = identity)."""
    B, T = tokens.shape
    D = dim
    assert D % heads == 0
    M = B * T

    x = (params["tok"][tokens] + params["pos"][:, :T]).reshape(M, D)   # f32 residual
    # dropout(0.1): identity at inference

    for i, layer in enumerate(params["layers"]):
        use_fenwick = (i % 2 == 1)
        # LN1 -> QKV projection (fused)
        qkv = ln_matmul(x, layer["ln1_w"], layer["ln1_b"],
                        layer["qkv_w"], layer["qkv_b"],
                        gelu=False, out_dtype=jnp.bfloat16)             # (M, 3D)
        # flash attention; even layers (nn.MultiheadAttention) are unmasked
        o = attention(qkv, B, T, heads,
                      fenwick_tables=((fenwick_kv_ids, fenwick_kv_counts)
                                      if use_fenwick else None))        # (M, D) bf16
        # output projection + residual (fused)
        x = linear_residual(o, layer["proj_w"], layer["proj_b"], x)     # (M, D) f32
        # LN2 -> MLP-in -> exact GELU (fused)
        h = ln_matmul(x, layer["ln2_w"], layer["ln2_b"],
                      layer["mlp_w1"], layer["mlp_b1"],
                      gelu=True, out_dtype=jnp.bfloat16)                # (M, 4D)
        # MLP-out + residual (fused)
        x = linear_residual(h, layer["mlp_w2"], layer["mlp_b2"], x)     # (M, D) f32

    # final LayerNorm -> vocab head (fused, vocab axis tiled / padded)
    logits = ln_matmul(x, params["fn_w"], params["fn_b"],
                       params["head_w"], params["head_b"],
                       gelu=False, out_dtype=jnp.float32)
    return logits.reshape(B, T, -1)


# --------------------------------- main --------------------------------------

if __name__ == "__main__":
    # Small, forward-consistent shapes.
    VOCAB, DIM, DEPTH, HEADS, MAX_SEQ = 64, 32, 2, 4, 16
    B, T = 2, 8

    key = jax.random.PRNGKey(0)
    pkey, ikey = jax.random.split(key)
    params = init_params(pkey, VOCAB, DIM, DEPTH, HEADS, MAX_SEQ)
    tokens = jax.random.randint(ikey, (B, T), 0, VOCAB, dtype=jnp.int32)

    # Block-sparse KV tables for the Fenwick (odd) layers.
    kv_ids, kv_counts = fenwick_kv_tables(T)

    fwd = jax.jit(functools.partial(forward, dim=DIM, heads=HEADS))
    logits = jax.block_until_ready(fwd(tokens, params, kv_ids, kv_counts))

    assert logits.shape == (B, T, VOCAB)
    assert bool(jnp.all(jnp.isfinite(logits)))
    print("KERNEL_OK")
</pallas_src>

<mosaic_0001>
module attributes {stable_mosaic.version = 11 : i64} {
  func.func @_ln_matmul_kernel(%arg0: i32, %arg1: i32, %arg2: memref<16x32xf32, #tpu.memory_space<vmem>>, %arg3: memref<1x32xf32, #tpu.memory_space<vmem>>, %arg4: memref<1x32xf32, #tpu.memory_space<vmem>>, %arg5: memref<32x96xbf16, #tpu.memory_space<vmem>>, %arg6: memref<1x96xf32, #tpu.memory_space<vmem>>, %arg7: memref<16x96xbf16, #tpu.memory_space<vmem>>, %arg8: memref<16x32xbf16, #tpu.memory_space<vmem>>) attributes {dimension_semantics = [#tpu.dimension_semantics<parallel>, #tpu.dimension_semantics<arbitrary>], iteration_bounds = array<i64: 1, 1>, scalar_prefetch = 0 : i64, scratch_operands = 1 : i64, tpu.core_type = #tpu.core_type<tc>, window_params = [{transform_indices = @transform_0, window_bounds = array<i64: 16, 32>}, {pipeline_mode = #tpu.pipeline_mode<synchronous>, transform_indices = @transform_1, window_bounds = array<i64: 1, 32>}, {pipeline_mode = #tpu.pipeline_mode<synchronous>, transform_indices = @transform_2, window_bounds = array<i64: 1, 32>}, {transform_indices = @transform_3, window_bounds = array<i64: 32, 96>}, {transform_indices = @transform_4, window_bounds = array<i64: 1, 96>}, {transform_indices = @transform_5, window_bounds = array<i64: 16, 96>}]} {
    %c0_i32 = arith.constant 0 : i32
    %0 = arith.cmpi eq, %arg1, %c0_i32 : i32
    %1 = arith.extui %0 : i1 to i32
    %c0_i32_0 = arith.constant 0 : i32
    %2 = arith.cmpi ne, %1, %c0_i32_0 : i32
    scf.if %2 {
      %c0_8 = arith.constant 0 : index
      %c0_9 = arith.constant 0 : index
      %11 = vector.load %arg2[%c0_8, %c0_9] : memref<16x32xf32, #tpu.memory_space<vmem>>, vector<16x32xf32>
      %cst_10 = arith.constant dense<0.000000e+00> : vector<16xf32>
      %12 = vector.multi_reduction <add>, %11, %cst_10 [1] : vector<16x32xf32> to vector<16xf32>
      %13 = vector.shape_cast %12 : vector<16xf32> to vector<16x1xf32>
      %cst_11 = arith.constant 3.200000e+01 : f32
      %14 = vector.broadcast %cst_11 : f32 to vector<16x1xf32>
      %15 = arith.divf %13, %14 : vector<16x1xf32>
      %16 = vector.broadcast %15 : vector<16x1xf32> to vector<16x32xf32>
      %17 = arith.subf %11, %16 : vector<16x32xf32>
      %18 = arith.mulf %17, %17 : vector<16x32xf32>
      %cst_12 = arith.constant dense<0.000000e+00> : vector<16xf32>
      %19 = vector.multi_reduction <add>, %18, %cst_12 [1] : vector<16x32xf32> to vector<16xf32>
      %20 = vector.shape_cast %19 : vector<16xf32> to vector<16x1xf32>
      %cst_13 = arith.constant 3.200000e+01 : f32
      %21 = vector.broadcast %cst_13 : f32 to vector<16x1xf32>
      %22 = arith.divf %20, %21 : vector<16x1xf32>
      %cst_14 = arith.constant 9.99999974E-6 : f32
      %23 = vector.broadcast %cst_14 : f32 to vector<16x1xf32>
      %24 = arith.addf %22, %23 : vector<16x1xf32>
      %25 = math.rsqrt %24 : vector<16x1xf32>
      %26 = vector.broadcast %25 : vector<16x1xf32> to vector<16x32xf32>
      %27 = arith.mulf %17, %26 : vector<16x32xf32>
      %c0_15 = arith.constant 0 : index
      %c0_16 = arith.constant 0 : index
      %28 = vector.load %arg3[%c0_15, %c0_16] : memref<1x32xf32, #tpu.memory_space<vmem>>, vector<1x32xf32>
      %29 = vector.broadcast %28 : vector<1x32xf32> to vector<16x32xf32>
      %30 = arith.mulf %27, %29 : vector<16x32xf32>
      %c0_17 = arith.constant 0 : index
      %c0_18 = arith.constant 0 : index
      %31 = vector.load %arg4[%c0_17, %c0_18] : memref<1x32xf32, #tpu.memory_space<vmem>>, vector<1x32xf32>
      %32 = vector.broadcast %31 : vector<1x32xf32> to vector<16x32xf32>
      %33 = arith.addf %30, %32 : vector<16x32xf32>
      %34 = arith.truncf %33 : vector<16x32xf32> to vector<16x32xbf16>
      %c0_19 = arith.constant 0 : index
      %c0_20 = arith.constant 0 : index
      %35 = vector.load %arg8[%c0_19, %c0_20] : memref<16x32xbf16, #tpu.memory_space<vmem>>, vector<16x32xbf16>
      tpu.vector_store %arg8[%c0_19, %c0_20], %34 {strides = array<i32>} : memref<16x32xbf16, #tpu.memory_space<vmem>>, vector<16x32xbf16>,
    } else {
    }
    %c0 = arith.constant 0 : index
    %c0_1 = arith.constant 0 : index
    %3 = vector.load %arg8[%c0, %c0_1] : memref<16x32xbf16, #tpu.memory_space<vmem>>, vector<16x32xbf16>
    %c0_2 = arith.constant 0 : index
    %c0_3 = arith.constant 0 : index
    %4 = vector.load %arg5[%c0_2, %c0_3] : memref<32x96xbf16, #tpu.memory_space<vmem>>, vector<32x96xbf16>
    %cst = arith.constant dense<0.000000e+00> : vector<16x96xf32>
    %5 = tpu.matmul %3, %4, %cst {dimension_numbers = #tpu.dot_dimension_numbers<[1], [0], [0], [1], [0, 0, 1, 1], [], []>} : vector<16x32xbf16>, vector<32x96xbf16>, vector<16x96xf32> -> vector<16x96xf32>
    %c0_4 = arith.constant 0 : index
    %c0_5 = arith.constant 0 : index
    %6 = vector.load %arg6[%c0_4, %c0_5] : memref<1x96xf32, #tpu.memory_space<vmem>>, vector<1x96xf32>
    %7 = vector.broadcast %6 : vector<1x96xf32> to vector<16x96xf32>
    %8 = arith.addf %5, %7 : vector<16x96xf32>
    %9 = arith.truncf %8 : vector<16x96xf32> to vector<16x96xbf16>
    %c0_6 = arith.constant 0 : index
    %c0_7 = arith.constant 0 : index
    %10 = vector.load %arg7[%c0_6, %c0_7] : memref<16x96xbf16, #tpu.memory_space<vmem>>, vector<16x96xbf16>
    tpu.vector_store %arg7[%c0_6, %c0_7], %9 {strides = array<i32>} : memref<16x96xbf16, #tpu.memory_space<vmem>>, vector<16x96xbf16>,
    return
  }
  func.func @transform_0(%arg0: i32, %arg1: i32) -> (i32, i32) {
    %c0_i32 = arith.constant 0 : i32
    %c0_i32_0 = arith.constant 0 : i32
    return %arg0, %c0_i32 : i32, i32
  }
  func.func @transform_1(%arg0: i32, %arg1: i32) -> (i32, i32) {
    %c0_i32 = arith.constant 0 : i32
    %c0_i32_0 = arith.constant 0 : i32
    %c0_i32_1 = arith.constant 0 : i32
    return %c0_i32, %c0_i32_0 : i32, i32
  }
  func.func @transform_2(%arg0: i32, %arg1: i32) -> (i32, i32) {
    %c0_i32 = arith.constant 0 : i32
    %c0_i32_0 = arith.constant 0 : i32
    %c0_i32_1 = arith.constant 0 : i32
    return %c0_i32, %c0_i32_0 : i32, i32
  }
  func.func @transform_3(%arg0: i32, %arg1: i32) -> (i32, i32) {
    %c0_i32 = arith.constant 0 : i32
    %c0_i32_0 = arith.constant 0 : i32
    return %c0_i32, %arg1 : i32, i32
  }
  func.func @transform_4(%arg0: i32, %arg1: i32) -> (i32, i32) {
    %c0_i32 = arith.constant 0 : i32
    %c0_i32_0 = arith.constant 0 : i32
    return %c0_i32, %arg1 : i32, i32
  }
  func.func @transform_5(%arg0: i32, %arg1: i32) -> (i32, i32) {
    %c0_i32 = arith.constant 0 : i32
    return %arg0, %arg1 : i32, i32
  }
}

module attributes {stable_mosaic.version = 11 : i64} {
  func.func @_attn_dense_kernel(%arg0: i32, %arg1: i32, %arg2: i32, %arg3: memref<1x8x8xbf16, #tpu.memory_space<vmem>>, %arg4: memref<1x8x8xbf16, #tpu.memory_space<vmem>>, %arg5: memref<1x8x8xbf16, #tpu.memory_space<vmem>>, %arg6: memref<1x8x8xbf16, #tpu.memory_space<vmem>>, %arg7: memref<8x1xf32, #tpu.memory_space<vmem>>, %arg8: memref<8x1xf32, #tpu.memory_space<vmem>>, %arg9: memref<8x8xf32, #tpu.memory_space<vmem>>) attributes {dimension_semantics = [#tpu.dimension_semantics<parallel>, #tpu.dimension_semantics<parallel>, #tpu.dimension_semantics<arbitrary>], iteration_bounds = array<i64: 8, 1, 1>, scalar_prefetch = 0 : i64, scratch_operands = 3 : i64, tpu.core_type = #tpu.core_type<tc>, window_params = [{transform_indices = @transform_0, window_bounds = array<i64: 1, 8, 8>}, {transform_indices = @transform_1, window_bounds = array<i64: 1, 8, 8>}, {transform_indices = @transform_2, window_bounds = array<i64: 1, 8, 8>}, {transform_indices = @transform_3, window_bounds = array<i64: 1, 8, 8>}]} {
    %c0_i32 = arith.constant 0 : i32
    %0 = arith.cmpi eq, %arg2, %c0_i32 : i32
    %1 = arith.extui %0 : i1 to i32
    %c0_i32_0 = arith.constant 0 : i32
    %2 = arith.cmpi ne, %1, %c0_i32_0 : i32
    scf.if %2 {
      %cst_26 = arith.constant -1.000000e+30 : f32
      %36 = vector.broadcast %cst_26 : f32 to vector<8x1xf32>
      %c0_27 = arith.constant 0 : index
      %c0_28 = arith.constant 0 : index
      %37 = vector.load %arg7[%c0_27, %c0_28] : memref<8x1xf32, #tpu.memory_space<vmem>>, vector<8x1xf32>
      tpu.vector_store %arg7[%c0_27, %c0_28], %36 {strides = array<i32>} : memref<8x1xf32, #tpu.memory_space<vmem>>, vector<8x1xf32>,
      %cst_29 = arith.constant 0.000000e+00 : f32
      %38 = vector.broadcast %cst_29 : f32 to vector<8x1xf32>
      %c0_30 = arith.constant 0 : index
      %c0_31 = arith.constant 0 : index
      %39 = vector.load %arg8[%c0_30, %c0_31] : memref<8x1xf32, #tpu.memory_space<vmem>>, vector<8x1xf32>
      tpu.vector_store %arg8[%c0_30, %c0_31], %38 {strides = array<i32>} : memref<8x1xf32, #tpu.memory_space<vmem>>, vector<8x1xf32>,
      %cst_32 = arith.constant 0.000000e+00 : f32
      %40 = vector.broadcast %cst_32 : f32 to vector<8x8xf32>
      %c0_33 = arith.constant 0 : index
      %c0_34 = arith.constant 0 : index
      %41 = vector.load %arg9[%c0_33, %c0_34] : memref<8x8xf32, #tpu.memory_space<vmem>>, vector<8x8xf32>
      tpu.vector_store %arg9[%c0_33, %c0_34], %40 {strides = array<i32>} : memref<8x8xf32, #tpu.memory_space<vmem>>, vector<8x8xf32>,
    } else {
    }
    %c0 = arith.constant 0 : index
    %c0_1 = arith.constant 0 : index
    %c0_2 = arith.constant 0 : index
    %3 = vector.load %arg3[%c0, %c0_1, %c0_2] : memref<1x8x8xbf16, #tpu.memory_space<vmem>>, vector<1x8x8xbf16>
    %4 = vector.shape_cast %3 : vector<1x8x8xbf16> to vector<8x8xbf16>
    %c0_3 = arith.constant 0 : index
    %c0_4 = arith.constant 0 : index
    %c0_5 = arith.constant 0 : index
    %5 = vector.load %arg4[%c0_3, %c0_4, %c0_5] : memref<1x8x8xbf16, #tpu.memory_space<vmem>>, vector<1x8x8xbf16>
    %6 = vector.shape_cast %5 : vector<1x8x8xbf16> to vector<8x8xbf16>
    %cst = arith.constant dense<0.000000e+00> : vector<8x8xf32>
    %7 = tpu.matmul %4, %6, %cst {dimension_numbers = #tpu.dot_dimension_numbers<[1], [1], [0], [0], [0, 0, 1, 0], [], []>} : vector<8x8xbf16>, vector<8x8xbf16>, vector<8x8xf32> -> vector<8x8xf32>
    %c0_6 = arith.constant 0 : index
    %c0_7 = arith.constant 0 : index
    %c0_8 = arith.constant 0 : index
    %8 = vector.load %arg5[%c0_6, %c0_7, %c0_8] : memref<1x8x8xbf16, #tpu.memory_space<vmem>>, vector<1x8x8xbf16>
    %9 = vector.shape_cast %8 : vector<1x8x8xbf16> to vector<8x8xbf16>
    %c0_9 = arith.constant 0 : index
    %c0_10 = arith.constant 0 : index
    %10 = vector.load %arg7[%c0_9, %c0_10] : memref<8x1xf32, #tpu.memory_space<vmem>>, vector<8x1xf32>
    %cst_11 = arith.constant dense<0xFF800000> : vector<8xf32>
    %11 = vector.multi_reduction <maximumf>, %7, %cst_11 [1] : vector<8x8xf32> to vector<8xf32>
    %12 = vector.shape_cast %11 : vector<8xf32> to vector<8x1xf32>
    %13 = arith.maximumf %10, %12 : vector<8x1xf32>
    %14 = arith.subf %10, %13 : vector<8x1xf32>
    %15 = math.exp %14 : vector<8x1xf32>
    %16 = vector.broadcast %13 : vector<8x1xf32> to vector<8x8xf32>
    %17 = arith.subf %7, %16 : vector<8x8xf32>
    %18 = math.exp %17 : vector<8x8xf32>
    %c0_12 = arith.constant 0 : index
    %c0_13 = arith.constant 0 : index
    %19 = vector.load %arg8[%c0_12, %c0_13] : memref<8x1xf32, #tpu.memory_space<vmem>>, vector<8x1xf32>
    %20 = arith.mulf %15, %19 : vector<8x1xf32>
    %cst_14 = arith.constant dense<0.000000e+00> : vector<8xf32>
    %21 = vector.multi_reduction <add>, %18, %cst_14 [1] : vector<8x8xf32> to vector<8xf32>
    %22 = vector.shape_cast %21 : vector<8xf32> to vector<8x1xf32>
    %23 = arith.addf %20, %22 : vector<8x1xf32>
    %c0_15 = arith.constant 0 : index
    %c0_16 = arith.constant 0 : index
    %24 = vector.load %arg8[%c0_15, %c0_16] : memref<8x1xf32, #tpu.memory_space<vmem>>, vector<8x1xf32>
    tpu.vector_store %arg8[%c0_15, %c0_16], %23 {strides = array<i32>} : memref<8x1xf32, #tpu.memory_space<vmem>>, vector<8x1xf32>,
    %c0_17 = arith.constant 0 : index
    %c0_18 = arith.constant 0 : index
    %25 = vector.load %arg9[%c0_17, %c0_18] : memref<8x8xf32, #tpu.memory_space<vmem>>, vector<8x8xf32>
    %26 = vector.broadcast %15 : vector<8x1xf32> to vector<8x8xf32>
    %27 = arith.mulf %26, %25 : vector<8x8xf32>
    %28 = arith.truncf %18 : vector<8x8xf32> to vector<8x8xbf16>
    %cst_19 = arith.constant dense<0.000000e+00> : vector<8x8xf32>
    %29 = tpu.matmul %28, %9, %cst_19 {dimension_numbers = #tpu.dot_dimension_numbers<[1], [0], [0], [1], [0, 0, 1, 1], [], []>} : vector<8x8xbf16>, vector<8x8xbf16>, vector<8x8xf32> -> vector<8x8xf32>
    %30 = arith.addf %27, %29 : vector<8x8xf32>
    %c0_20 = arith.constant 0 : index
    %c0_21 = arith.constant 0 : index
    %31 = vector.load %arg9[%c0_20, %c0_21] : memref<8x8xf32, #tpu.memory_space<vmem>>, vector<8x8xf32>
    tpu.vector_store %arg9[%c0_20, %c0_21], %30 {strides = array<i32>} : memref<8x8xf32, #tpu.memory_space<vmem>>, vector<8x8xf32>,
    %c0_22 = arith.constant 0 : index
    %c0_23 = arith.constant 0 : index
    %32 = vector.load %arg7[%c0_22, %c0_23] : memref<8x1xf32, #tpu.memory_space<vmem>>, vector<8x1xf32>
    tpu.vector_store %arg7[%c0_22, %c0_23], %13 {strides = array<i32>} : memref<8x1xf32, #tpu.memory_space<vmem>>, vector<8x1xf32>,
    %c0_i32_24 = arith.constant 0 : i32
    %33 = arith.cmpi eq, %arg2, %c0_i32_24 : i32
    %34 = arith.extui %33 : i1 to i32
    %c0_i32_25 = arith.constant 0 : i32
    %35 = arith.cmpi ne, %34, %c0_i32_25 : i32
    scf.if %35 {
      %c0_26 = arith.constant 0 : index
      %c0_27 = arith.constant 0 : index
      %36 = vector.load %arg9[%c0_26, %c0_27] : memref<8x8xf32, #tpu.memory_space<vmem>>, vector<8x8xf32>
      %c0_28 = arith.constant 0 : index
      %c0_29 = arith.constant 0 : index
      %37 = vector.load %arg8[%c0_28, %c0_29] : memref<8x1xf32, #tpu.memory_space<vmem>>, vector<8x1xf32>
      %38 = tpu.reciprocal %37 {approx = true} : vector<8x1xf32> -> vector<8x1xf32>
      %39 = vector.broadcast %38 : vector<8x1xf32> to vector<8x8xf32>
      %40 = arith.mulf %36, %39 : vector<8x8xf32>
      %41 = arith.truncf %40 : vector<8x8xf32> to vector<8x8xbf16>
      %c0_30 = arith.constant 0 : index
      %c0_31 = arith.constant 0 : index
      %c0_32 = arith.constant 0 : index
      %42 = vector.load %arg6[%c0_30, %c0_31, %c0_32] : memref<1x8x8xbf16, #tpu.memory_space<vmem>>, vector<1x8x8xbf16>
      %43 = vector.shape_cast %42 : vector<1x8x8xbf16> to vector<8x8xbf16>
      %44 = vector.shape_cast %41 : vector<8x8xbf16> to vector<1x8x8xbf16>
      tpu.vector_store %arg6[%c0_30, %c0_31, %c0_32], %44 {strides = array<i32>} : memref<1x8x8xbf16, #tpu.memory_space<vmem>>, vector<1x8x8xbf16>,
    } else {
    }
    return
  }
  func.func @transform_0(%arg0: i32, %arg1: i32, %arg2: i32) -> (i32, i32, i32) {
    %c0_i32 = arith.constant 0 : i32
    %c0_i32_0 = arith.constant 0 : i32
    return %arg0, %arg1, %c0_i32 : i32, i32, i32
  }
  func.func @transform_1(%arg0: i32, %arg1: i32, %arg2: i32) -> (i32, i32, i32) {
    %c8_i32 = arith.constant 8 : i32
    %0 = arith.addi %c8_i32, %arg0 : i32
    %c0_i32 = arith.constant 0 : i32
    %c0_i32_0 = arith.constant 0 : i32
    return %0, %arg2, %c0_i32 : i32, i32, i32
  }
  func.func @transform_2(%arg0: i32, %arg1: i32, %arg2: i32) -> (i32, i32, i32) {
    %c16_i32 = arith.constant 16 : i32
    %0 = arith.addi %c16_i32, %arg0 : i32
    %c0_i32 = arith.constant 0 : i32
    %c0_i32_0 = arith.constant 0 : i32
    return %0, %arg2, %c0_i32 : i32, i32, i32
  }
  func.func @transform_3(%arg0: i32, %arg1: i32, %arg2: i32) -> (i32, i32, i32) {
    %c0_i32 = arith.constant 0 : i32
    %c0_i32_0 = arith.constant 0 : i32
    return %arg0, %arg1, %c0_i32 : i32, i32, i32
  }
}

module attributes {stable_mosaic.version = 11 : i64} {
  func.func @_matmul_res_kernel(%arg0: i32, %arg1: i32, %arg2: i32, %arg3: memref<16x32xbf16, #tpu.memory_space<vmem>>, %arg4: memref<32x32xbf16, #tpu.memory_space<vmem>>, %arg5: memref<1x32xf32, #tpu.memory_space<vmem>>, %arg6: memref<16x32xf32, #tpu.memory_space<vmem>>, %arg7: memref<16x32xf32, #tpu.memory_space<vmem>>, %arg8: memref<16x32xf32, #tpu.memory_space<vmem>>) attributes {dimension_semantics = [#tpu.dimension_semantics<parallel>, #tpu.dimension_semantics<parallel>, #tpu.dimension_semantics<arbitrary>], iteration_bounds = array<i64: 1, 1, 1>, scalar_prefetch = 0 : i64, scratch_operands = 1 : i64, tpu.core_type = #tpu.core_type<tc>, window_params = [{transform_indices = @transform_0, window_bounds = array<i64: 16, 32>}, {transform_indices = @transform_1, window_bounds = array<i64: 32, 32>}, {transform_indices = @transform_2, window_bounds = array<i64: 1, 32>}, {transform_indices = @transform_3, window_bounds = array<i64: 16, 32>}, {transform_indices = @transform_4, window_bounds = array<i64: 16, 32>}]} {
    %c0_i32 = arith.constant 0 : i32
    %0 = arith.cmpi eq, %arg2, %c0_i32 : i32
    %1 = arith.extui %0 : i1 to i32
    %c0_i32_0 = arith.constant 0 : i32
    %2 = arith.cmpi ne, %1, %c0_i32_0 : i32
    scf.if %2 {
      %cst_10 = arith.constant 0.000000e+00 : f32
      %12 = vector.broadcast %cst_10 : f32 to vector<16x32xf32>
      %c0_11 = arith.constant 0 : index
      %c0_12 = arith.constant 0 : index
      %13 = vector.load %arg8[%c0_11, %c0_12] : memref<16x32xf32, #tpu.memory_space<vmem>>, vector<16x32xf32>
      tpu.vector_store %arg8[%c0_11, %c0_12], %12 {strides = array<i32>} : memref<16x32xf32, #tpu.memory_space<vmem>>, vector<16x32xf32>,
    } else {
    }
    %c0 = arith.constant 0 : index
    %c0_1 = arith.constant 0 : index
    %3 = vector.load %arg8[%c0, %c0_1] : memref<16x32xf32, #tpu.memory_space<vmem>>, vector<16x32xf32>
    %c0_2 = arith.constant 0 : index
    %c0_3 = arith.constant 0 : index
    %4 = vector.load %arg3[%c0_2, %c0_3] : memref<16x32xbf16, #tpu.memory_space<vmem>>, vector<16x32xbf16>
    %c0_4 = arith.constant 0 : index
    %c0_5 = arith.constant 0 : index
    %5 = vector.load %arg4[%c0_4, %c0_5] : memref<32x32xbf16, #tpu.memory_space<vmem>>, vector<32x32xbf16>
    %cst = arith.constant dense<0.000000e+00> : vector<16x32xf32>
    %6 = tpu.matmul %4, %5, %cst {dimension_numbers = #tpu.dot_dimension_numbers<[1], [0], [0], [1], [0, 0, 1, 1], [], []>} : vector<16x32xbf16>, vector<32x32xbf16>, vector<16x32xf32> -> vector<16x32xf32>
    %7 = arith.addf %3, %6 : vector<16x32xf32>
    %c0_6 = arith.constant 0 : index
    %c0_7 = arith.constant 0 : index
    %8 = vector.load %arg8[%c0_6, %c0_7] : memref<16x32xf32, #tpu.memory_space<vmem>>, vector<16x32xf32>
    tpu.vector_store %arg8[%c0_6, %c0_7], %7 {strides = array<i32>} : memref<16x32xf32, #tpu.memory_space<vmem>>, vector<16x32xf32>,
    %c0_i32_8 = arith.constant 0 : i32
    %9 = arith.cmpi eq, %arg2, %c0_i32_8 : i32
    %10 = arith.extui %9 : i1 to i32
    %c0_i32_9 = arith.constant 0 : i32
    %11 = arith.cmpi ne, %10, %c0_i32_9 : i32
    scf.if %11 {
      %c0_10 = arith.constant 0 : index
      %c0_11 = arith.constant 0 : index
      %12 = vector.load %arg8[%c0_10, %c0_11] : memref<16x32xf32, #tpu.memory_space<vmem>>, vector<16x32xf32>
      %c0_12 = arith.constant 0 : index
      %c0_13 = arith.constant 0 : index
      %13 = vector.load %arg5[%c0_12, %c0_13] : memref<1x32xf32, #tpu.memory_space<vmem>>, vector<1x32xf32>
      %14 = vector.broadcast %13 : vector<1x32xf32> to vector<16x32xf32>
      %15 = arith.addf %12, %14 : vector<16x32xf32>
      %c0_14 = arith.constant 0 : index
      %c0_15 = arith.constant 0 : index
      %16 = vector.load %arg6[%c0_14, %c0_15] : memref<16x32xf32, #tpu.memory_space<vmem>>, vector<16x32xf32>
      %17 = arith.addf %15, %16 : vector<16x32xf32>
      %c0_16 = arith.constant 0 : index
      %c0_17 = arith.constant 0 : index
      %18 = vector.load %arg7[%c0_16, %c0_17] : memref<16x32xf32, #tpu.memory_space<vmem>>, vector<16x32xf32>
      tpu.vector_store %arg7[%c0_16, %c0_17], %17 {strides = array<i32>} : memref<16x32xf32, #tpu.memory_space<vmem>>, vector<16x32xf32>,
    } else {
    }
    return
  }
  func.func @transform_0(%arg0: i32, %arg1: i32, %arg2: i32) -> (i32, i32) {
    %c0_i32 = arith.constant 0 : i32
    return %arg0, %arg2 : i32, i32
  }
  func.func @transform_1(%arg0: i32, %arg1: i32, %arg2: i32) -> (i32, i32) {
    %c0_i32 = arith.constant 0 : i32
    return %arg2, %arg1 : i32, i32
  }
  func.func @transform_2(%arg0: i32, %arg1: i32, %arg2: i32) -> (i32, i32) {
    %c0_i32 = arith.constant 0 : i32
    %c0_i32_0 = arith.constant 0 : i32
    return %c0_i32, %arg1 : i32, i32
  }
  func.func @transform_3(%arg0: i32, %arg1: i32, %arg2: i32) -> (i32, i32) {
    %c0_i32 = arith.constant 0 : i32
    return %arg0, %arg1 : i32, i32
  }
  func.func @transform_4(%arg0: i32, %arg1: i32, %arg2: i32) -> (i32, i32) {
    %c0_i32 = arith.constant 0 : i32
    return %arg0, %arg1 : i32, i32
  }
}

module attributes {stable_mosaic.version = 11 : i64} {
  func.func @_ln_matmul_kernel(%arg0: i32, %arg1: i32, %arg2: memref<16x32xf32, #tpu.memory_space<vmem>>, %arg3: memref<1x32xf32, #tpu.memory_space<vmem>>, %arg4: memref<1x32xf32, #tpu.memory_space<vmem>>, %arg5: memref<32x128xbf16, #tpu.memory_space<vmem>>, %arg6: memref<1x128xf32, #tpu.memory_space<vmem>>, %arg7: memref<16x128xbf16, #tpu.memory_space<vmem>>, %arg8: memref<16x32xbf16, #tpu.memory_space<vmem>>) attributes {dimension_semantics = [#tpu.dimension_semantics<parallel>, #tpu.dimension_semantics<arbitrary>], iteration_bounds = array<i64: 1, 1>, scalar_prefetch = 0 : i64, scratch_operands = 1 : i64, tpu.core_type = #tpu.core_type<tc>, window_params = [{transform_indices = @transform_0, window_bounds = array<i64: 16, 32>}, {pipeline_mode = #tpu.pipeline_mode<synchronous>, transform_indices = @transform_1, window_bounds = array<i64: 1, 32>}, {pipeline_mode = #tpu.pipeline_mode<synchronous>, transform_indices = @transform_2, window_bounds = array<i64: 1, 32>}, {transform_indices = @transform_3, window_bounds = array<i64: 32, 128>}, {transform_indices = @transform_4, window_bounds = array<i64: 1, 128>}, {transform_indices = @transform_5, window_bounds = array<i64: 16, 128>}]} {
    %c0_i32 = arith.constant 0 : i32
    %0 = arith.cmpi eq, %arg1, %c0_i32 : i32
    %1 = arith.extui %0 : i1 to i32
    %c0_i32_0 = arith.constant 0 : i32
    %2 = arith.cmpi ne, %1, %c0_i32_0 : i32
    scf.if %2 {
      %c0_23 = arith.constant 0 : index
      %c0_24 = arith.constant 0 : index
      %51 = vector.load %arg2[%c0_23, %c0_24] : memref<16x32xf32, #tpu.memory_space<vmem>>, vector<16x32xf32>
      %cst_25 = arith.constant dense<0.000000e+00> : vector<16xf32>
      %52 = vector.multi_reduction <add>, %51, %cst_25 [1] : vector<16x32xf32> to vector<16xf32>
      %53 = vector.shape_cast %52 : vector<16xf32> to vector<16x1xf32>
      %cst_26 = arith.constant 3.200000e+01 : f32
      %54 = vector.broadcast %cst_26 : f32 to vector<16x1xf32>
      %55 = arith.divf %53, %54 : vector<16x1xf32>
      %56 = vector.broadcast %55 : vector<16x1xf32> to vector<16x32xf32>
      %57 = arith.subf %51, %56 : vector<16x32xf32>
      %58 = arith.mulf %57, %57 : vector<16x32xf32>
      %cst_27 = arith.constant dense<0.000000e+00> : vector<16xf32>
      %59 = vector.multi_reduction <add>, %58, %cst_27 [1] : vector<16x32xf32> to vector<16xf32>
      %60 = vector.shape_cast %59 : vector<16xf32> to vector<16x1xf32>
      %cst_28 = arith.constant 3.200000e+01 : f32
      %61 = vector.broadcast %cst_28 : f32 to vector<16x1xf32>
      %62 = arith.divf %60, %61 : vector<16x1xf32>
      %cst_29 = arith.constant 9.99999974E-6 : f32
      %63 = vector.broadcast %cst_29 : f32 to vector<16x1xf32>
      %64 = arith.addf %62, %63 : vector<16x1xf32>
      %65 = math.rsqrt %64 : vector<16x1xf32>
      %66 = vector.broadcast %65 : vector<16x1xf32> to vector<16x32xf32>
      %67 = arith.mulf %57, %66 : vector<16x32xf32>
      %c0_30 = arith.constant 0 : index
      %c0_31 = arith.constant 0 : index
      %68 = vector.load %arg3[%c0_30, %c0_31] : memref<1x32xf32, #tpu.memory_space<vmem>>, vector<1x32xf32>
      %69 = vector.broadcast %68 : vector<1x32xf32> to vector<16x32xf32>
      %70 = arith.mulf %67, %69 : vector<16x32xf32>
      %c0_32 = arith.constant 0 : index
      %c0_33 = arith.constant 0 : index
      %71 = vector.load %arg4[%c0_32, %c0_33] : memref<1x32xf32, #tpu.memory_space<vmem>>, vector<1x32xf32>
      %72 = vector.broadcast %71 : vector<1x32xf32> to vector<16x32xf32>
      %73 = arith.addf %70, %72 : vector<16x32xf32>
      %74 = arith.truncf %73 : vector<16x32xf32> to vector<16x32xbf16>
      %c0_34 = arith.constant 0 : index
      %c0_35 = arith.constant 0 : index
      %75 = vector.load %arg8[%c0_34, %c0_35] : memref<16x32xbf16, #tpu.memory_space<vmem>>, vector<16x32xbf16>
      tpu.vector_store %arg8[%c0_34, %c0_35], %74 {strides = array<i32>} : memref<16x32xbf16, #tpu.memory_space<vmem>>, vector<16x32xbf16>,
    } else {
    }
    %c0 = arith.constant 0 : index
    %c0_1 = arith.constant 0 : index
    %3 = vector.load %arg8[%c0, %c0_1] : memref<16x32xbf16, #tpu.memory_space<vmem>>, vector<16x32xbf16>
    %c0_2 = arith.constant 0 : index
    %c0_3 = arith.constant 0 : index
    %4 = vector.load %arg5[%c0_2, %c0_3] : memref<32x128xbf16, #tpu.memory_space<vmem>>, vector<32x128xbf16>
    %cst = arith.constant dense<0.000000e+00> : vector<16x128xf32>
    %5 = tpu.matmul %3, %4, %cst {dimension_numbers = #tpu.dot_dimension_numbers<[1], [0], [0], [1], [0, 0, 1, 1], [], []>} : vector<16x32xbf16>, vector<32x128xbf16>, vector<16x128xf32> -> vector<16x128xf32>
    %c0_4 = arith.constant 0 : index
    %c0_5 = arith.constant 0 : index
    %6 = vector.load %arg6[%c0_4, %c0_5] : memref<1x128xf32, #tpu.memory_space<vmem>>, vector<1x128xf32>
    %7 = vector.broadcast %6 : vector<1x128xf32> to vector<16x128xf32>
    %8 = arith.addf %5, %7 : vector<16x128xf32>
    %cst_6 = arith.constant 0.707106769 : f32
    %9 = vector.broadcast %cst_6 : f32 to vector<16x128xf32>
    %10 = arith.mulf %8, %9 : vector<16x128xf32>
    %cst_7 = arith.constant 0.000000e+00 : f32
    %11 = vector.broadcast %cst_7 : f32 to vector<16x128xf32>
    %12 = arith.cmpf olt, %10, %11 : vector<16x128xf32>
    %cst_8 = arith.constant -1.000000e+00 : f32
    %cst_9 = arith.constant 1.000000e+00 : f32
    %13 = vector.broadcast %cst_8 : f32 to vector<16x128xf32>
    %14 = vector.broadcast %cst_9 : f32 to vector<16x128xf32>
    %15 = arith.select %12, %13, %14 : vector<16x128xi1>, vector<16x128xf32>
    %16 = math.absf %10 : vector<16x128xf32>
    %cst_10 = arith.constant 0.327591091 : f32
    %17 = vector.broadcast %cst_10 : f32 to vector<16x128xf32>
    %18 = arith.mulf %17, %16 : vector<16x128xf32>
    %cst_11 = arith.constant 1.000000e+00 : f32
    %19 = vector.broadcast %cst_11 : f32 to vector<16x128xf32>
    %20 = arith.addf %19, %18 : vector<16x128xf32>
    %21 = tpu.reciprocal %20 {approx = true} : vector<16x128xf32> -> vector<16x128xf32>
    %cst_12 = arith.constant 1.06140542 : f32
    %22 = vector.broadcast %cst_12 : f32 to vector<16x128xf32>
    %23 = arith.mulf %22, %21 : vector<16x128xf32>
    %cst_13 = arith.constant -1.45315206 : f32
    %24 = vector.broadcast %cst_13 : f32 to vector<16x128xf32>
    %25 = arith.addf %23, %24 : vector<16x128xf32>
    %26 = arith.mulf %25, %21 : vector<16x128xf32>
    %cst_14 = arith.constant 1.42141378 : f32
    %27 = vector.broadcast %cst_14 : f32 to vector<16x128xf32>
    %28 = arith.addf %26, %27 : vector<16x128xf32>
    %29 = arith.mulf %28, %21 : vector<16x128xf32>
    %cst_15 = arith.constant -0.284496725 : f32
    %30 = vector.broadcast %cst_15 : f32 to vector<16x128xf32>
    %31 = arith.addf %29, %30 : vector<16x128xf32>
    %32 = arith.mulf %31, %21 : vector<16x128xf32>
    %cst_16 = arith.constant 0.254829586 : f32
    %33 = vector.broadcast %cst_16 : f32 to vector<16x128xf32>
    %34 = arith.addf %32, %33 : vector<16x128xf32>
    %35 = arith.mulf %34, %21 : vector<16x128xf32>
    %cst_17 = arith.constant 0.000000e+00 : f32
    %36 = vector.broadcast %cst_17 : f32 to vector<16x128xf32>
    %37 = arith.subf %36, %16 : vector<16x128xf32>
    %38 = arith.mulf %37, %16 : vector<16x128xf32>
    %39 = math.exp %38 : vector<16x128xf32>
    %40 = arith.mulf %35, %39 : vector<16x128xf32>
    %cst_18 = arith.constant 1.000000e+00 : f32
    %41 = vector.broadcast %cst_18 : f32 to vector<16x128xf32>
    %42 = arith.subf %41, %40 : vector<16x128xf32>
    %43 = arith.mulf %15, %42 : vector<16x128xf32>
    %cst_19 = arith.constant 5.000000e-01 : f32
    %44 = vector.broadcast %cst_19 : f32 to vector<16x128xf32>
    %45 = arith.mulf %44, %8 : vector<16x128xf32>
    %cst_20 = arith.constant 1.000000e+00 : f32
    %46 = vector.broadcast %cst_20 : f32 to vector<16x128xf32>
    %47 = arith.addf %46, %43 : vector<16x128xf32>
    %48 = arith.mulf %45, %47 : vector<16x128xf32>
    %49 = arith.truncf %48 : vector<16x128xf32> to vector<16x128xbf16>
    %c0_21 = arith.constant 0 : index
    %c0_22 = arith.constant 0 : index
    %50 = vector.load %arg7[%c0_21, %c0_22] : memref<16x128xbf16, #tpu.memory_space<vmem>>, vector<16x128xbf16>
    tpu.vector_store %arg7[%c0_21, %c0_22], %49 {strides = array<i32>} : memref<16x128xbf16, #tpu.memory_space<vmem>>, vector<16x128xbf16>,
    return
  }
  func.func @transform_0(%arg0: i32, %arg1: i32) -> (i32, i32) {
    %c0_i32 = arith.constant 0 : i32
    %c0_i32_0 = arith.constant 0 : i32
    return %arg0, %c0_i32 : i32, i32
  }
  func.func @transform_1(%arg0: i32, %arg1: i32) -> (i32, i32) {
    %c0_i32 = arith.constant 0 : i32
    %c0_i32_0 = arith.constant 0 : i32
    %c0_i32_1 = arith.constant 0 : i32
    return %c0_i32, %c0_i32_0 : i32, i32
  }
  func.func @transform_2(%arg0: i32, %arg1: i32) -> (i32, i32) {
    %c0_i32 = arith.constant 0 : i32
    %c0_i32_0 = arith.constant 0 : i32
    %c0_i32_1 = arith.constant 0 : i32
    return %c0_i32, %c0_i32_0 : i32, i32
  }
  func.func @transform_3(%arg0: i32, %arg1: i32) -> (i32, i32) {
    %c0_i32 = arith.constant 0 : i32
    %c0_i32_0 = arith.constant 0 : i32
    return %c0_i32, %arg1 : i32, i32
  }
  func.func @transform_4(%arg0: i32, %arg1: i32) -> (i32, i32) {
    %c0_i32 = arith.constant 0 : i32
    %c0_i32_0 = arith.constant 0 : i32
    return %c0_i32, %arg1 : i32, i32
  }
  func.func @transform_5(%arg0: i32, %arg1: i32) -> (i32, i32) {
    %c0_i32 = arith.constant 0 : i32
    return %arg0, %arg1 : i32, i32
  }
}

module attributes {stable_mosaic.version = 11 : i64} {
  func.func @_matmul_res_kernel(%arg0: i32, %arg1: i32, %arg2: i32, %arg3: memref<16x128xbf16, #tpu.memory_space<vmem>>, %arg4: memref<128x32xbf16, #tpu.memory_space<vmem>>, %arg5: memref<1x32xf32, #tpu.memory_space<vmem>>, %arg6: memref<16x32xf32, #tpu.memory_space<vmem>>, %arg7: memref<16x32xf32, #tpu.memory_space<vmem>>, %arg8: memref<16x32xf32, #tpu.memory_space<vmem>>) attributes {dimension_semantics = [#tpu.dimension_semantics<parallel>, #tpu.dimension_semantics<parallel>, #tpu.dimension_semantics<arbitrary>], iteration_bounds = array<i64: 1, 1, 1>, scalar_prefetch = 0 : i64, scratch_operands = 1 : i64, tpu.core_type = #tpu.core_type<tc>, window_params = [{transform_indices = @transform_0, window_bounds = array<i64: 16, 128>}, {transform_indices = @transform_1, window_bounds = array<i64: 128, 32>}, {transform_indices = @transform_2, window_bounds = array<i64: 1, 32>}, {transform_indices = @transform_3, window_bounds = array<i64: 16, 32>}, {transform_indices = @transform_4, window_bounds = array<i64: 16, 32>}]} {
    %c0_i32 = arith.constant 0 : i32
    %0 = arith.cmpi eq, %arg2, %c0_i32 : i32
    %1 = arith.extui %0 : i1 to i32
    %c0_i32_0 = arith.constant 0 : i32
    %2 = arith.cmpi ne, %1, %c0_i32_0 : i32
    scf.if %2 {
      %cst_10 = arith.constant 0.000000e+00 : f32
      %12 = vector.broadcast %cst_10 : f32 to vector<16x32xf32>
      %c0_11 = arith.constant 0 : index
      %c0_12 = arith.constant 0 : index
      %13 = vector.load %arg8[%c0_11, %c0_12] : memref<16x32xf32, #tpu.memory_space<vmem>>, vector<16x32xf32>
      tpu.vector_store %arg8[%c0_11, %c0_12], %12 {strides = array<i32>} : memref<16x32xf32, #tpu.memory_space<vmem>>, vector<16x32xf32>,
    } else {
    }
    %c0 = arith.constant 0 : index
    %c0_1 = arith.constant 0 : index
    %3 = vector.load %arg8[%c0, %c0_1] : memref<16x32xf32, #tpu.memory_space<vmem>>, vector<16x32xf32>
    %c0_2 = arith.constant 0 : index
    %c0_3 = arith.constant 0 : index
    %4 = vector.load %arg3[%c0_2, %c0_3] : memref<16x128xbf16, #tpu.memory_space<vmem>>, vector<16x128xbf16>
    %c0_4 = arith.constant 0 : index
    %c0_5 = arith.constant 0 : index
    %5 = vector.load %arg4[%c0_4, %c0_5] : memref<128x32xbf16, #tpu.memory_space<vmem>>, vector<128x32xbf16>
    %cst = arith.constant dense<0.000000e+00> : vector<16x32xf32>
    %6 = tpu.matmul %4, %5, %cst {dimension_numbers = #tpu.dot_dimension_numbers<[1], [0], [0], [1], [0, 0, 1, 1], [], []>} : vector<16x128xbf16>, vector<128x32xbf16>, vector<16x32xf32> -> vector<16x32xf32>
    %7 = arith.addf %3, %6 : vector<16x32xf32>
    %c0_6 = arith.constant 0 : index
    %c0_7 = arith.constant 0 : index
    %8 = vector.load %arg8[%c0_6, %c0_7] : memref<16x32xf32, #tpu.memory_space<vmem>>, vector<16x32xf32>
    tpu.vector_store %arg8[%c0_6, %c0_7], %7 {strides = array<i32>} : memref<16x32xf32, #tpu.memory_space<vmem>>, vector<16x32xf32>,
    %c0_i32_8 = arith.constant 0 : i32
    %9 = arith.cmpi eq, %arg2, %c0_i32_8 : i32
    %10 = arith.extui %9 : i1 to i32
    %c0_i32_9 = arith.constant 0 : i32
    %11 = arith.cmpi ne, %10, %c0_i32_9 : i32
    scf.if %11 {
      %c0_10 = arith.constant 0 : index
      %c0_11 = arith.constant 0 : index
      %12 = vector.load %arg8[%c0_10, %c0_11] : memref<16x32xf32, #tpu.memory_space<vmem>>, vector<16x32xf32>
      %c0_12 = arith.constant 0 : index
      %c0_13 = arith.constant 0 : index
      %13 = vector.load %arg5[%c0_12, %c0_13] : memref<1x32xf32, #tpu.memory_space<vmem>>, vector<1x32xf32>
      %14 = vector.broadcast %13 : vector<1x32xf32> to vector<16x32xf32>
      %15 = arith.addf %12, %14 : vector<16x32xf32>
      %c0_14 = arith.constant 0 : index
      %c0_15 = arith.constant 0 : index
      %16 = vector.load %arg6[%c0_14, %c0_15] : memref<16x32xf32, #tpu.memory_space<vmem>>, vector<16x32xf32>
      %17 = arith.addf %15, %16 : vector<16x32xf32>
      %c0_16 = arith.constant 0 : index
      %c0_17 = arith.constant 0 : index
      %18 = vector.load %arg7[%c0_16, %c0_17] : memref<16x32xf32, #tpu.memory_space<vmem>>, vector<16x32xf32>
      tpu.vector_store %arg7[%c0_16, %c0_17], %17 {strides = array<i32>} : memref<16x32xf32, #tpu.memory_space<vmem>>, vector<16x32xf32>,
    } else {
    }
    return
  }
  func.func @transform_0(%arg0: i32, %arg1: i32, %arg2: i32) -> (i32, i32) {
    %c0_i32 = arith.constant 0 : i32
    return %arg0, %arg2 : i32, i32
  }
  func.func @transform_1(%arg0: i32, %arg1: i32, %arg2: i32) -> (i32, i32) {
    %c0_i32 = arith.constant 0 : i32
    return %arg2, %arg1 : i32, i32
  }
  func.func @transform_2(%arg0: i32, %arg1: i32, %arg2: i32) -> (i32, i32) {
    %c0_i32 = arith.constant 0 : i32
    %c0_i32_0 = arith.constant 0 : i32
    return %c0_i32, %arg1 : i32, i32
  }
  func.func @transform_3(%arg0: i32, %arg1: i32, %arg2: i32) -> (i32, i32) {
    %c0_i32 = arith.constant 0 : i32
    return %arg0, %arg1 : i32, i32
  }
  func.func @transform_4(%arg0: i32, %arg1: i32, %arg2: i32) -> (i32, i32) {
    %c0_i32 = arith.constant 0 : i32
    return %arg0, %arg1 : i32, i32
  }
}

module attributes {stable_mosaic.version = 11 : i64} {
  func.func @_ln_matmul_kernel(%arg0: i32, %arg1: i32, %arg2: memref<16x32xf32, #tpu.memory_space<vmem>>, %arg3: memref<1x32xf32, #tpu.memory_space<vmem>>, %arg4: memref<1x32xf32, #tpu.memory_space<vmem>>, %arg5: memref<32x64xbf16, #tpu.memory_space<vmem>>, %arg6: memref<1x64xf32, #tpu.memory_space<vmem>>, %arg7: memref<16x64xf32, #tpu.memory_space<vmem>>, %arg8: memref<16x32xbf16, #tpu.memory_space<vmem>>) attributes {dimension_semantics = [#tpu.dimension_semantics<parallel>, #tpu.dimension_semantics<arbitrary>], iteration_bounds = array<i64: 1, 1>, scalar_prefetch = 0 : i64, scratch_operands = 1 : i64, tpu.core_type = #tpu.core_type<tc>, window_params = [{transform_indices = @transform_0, window_bounds = array<i64: 16, 32>}, {pipeline_mode = #tpu.pipeline_mode<synchronous>, transform_indices = @transform_1, window_bounds = array<i64: 1, 32>}, {pipeline_mode = #tpu.pipeline_mode<synchronous>, transform_indices = @transform_2, window_bounds = array<i64: 1, 32>}, {transform_indices = @transform_3, window_bounds = array<i64: 32, 64>}, {transform_indices = @transform_4, window_bounds = array<i64: 1, 64>}, {transform_indices = @transform_5, window_bounds = array<i64: 16, 64>}]} {
    %c0_i32 = arith.constant 0 : i32
    %0 = arith.cmpi eq, %arg1, %c0_i32 : i32
    %1 = arith.extui %0 : i1 to i32
    %c0_i32_0 = arith.constant 0 : i32
    %2 = arith.cmpi ne, %1, %c0_i32_0 : i32
    scf.if %2 {
      %c0_8 = arith.constant 0 : index
      %c0_9 = arith.constant 0 : index
      %10 = vector.load %arg2[%c0_8, %c0_9] : memref<16x32xf32, #tpu.memory_space<vmem>>, vector<16x32xf32>
      %cst_10 = arith.constant dense<0.000000e+00> : vector<16xf32>
      %11 = vector.multi_reduction <add>, %10, %cst_10 [1] : vector<16x32xf32> to vector<16xf32>
      %12 = vector.shape_cast %11 : vector<16xf32> to vector<16x1xf32>
      %cst_11 = arith.constant 3.200000e+01 : f32
      %13 = vector.broadcast %cst_11 : f32 to vector<16x1xf32>
      %14 = arith.divf %12, %13 : vector<16x1xf32>
      %15 = vector.broadcast %14 : vector<16x1xf32> to vector<16x32xf32>
      %16 = arith.subf %10, %15 : vector<16x32xf32>
      %17 = arith.mulf %16, %16 : vector<16x32xf32>
      %cst_12 = arith.constant dense<0.000000e+00> : vector<16xf32>
      %18 = vector.multi_reduction <add>, %17, %cst_12 [1] : vector<16x32xf32> to vector<16xf32>
      %19 = vector.shape_cast %18 : vector<16xf32> to vector<16x1xf32>
      %cst_13 = arith.constant 3.200000e+01 : f32
      %20 = vector.broadcast %cst_13 : f32 to vector<16x1xf32>
      %21 = arith.divf %19, %20 : vector<16x1xf32>
      %cst_14 = arith.constant 9.99999974E-6 : f32
      %22 = vector.broadcast %cst_14 : f32 to vector<16x1xf32>
      %23 = arith.addf %21, %22 : vector<16x1xf32>
      %24 = math.rsqrt %23 : vector<16x1xf32>
      %25 = vector.broadcast %24 : vector<16x1xf32> to vector<16x32xf32>
      %26 = arith.mulf %16, %25 : vector<16x32xf32>
      %c0_15 = arith.constant 0 : index
      %c0_16 = arith.constant 0 : index
      %27 = vector.load %arg3[%c0_15, %c0_16] : memref<1x32xf32, #tpu.memory_space<vmem>>, vector<1x32xf32>
      %28 = vector.broadcast %27 : vector<1x32xf32> to vector<16x32xf32>
      %29 = arith.mulf %26, %28 : vector<16x32xf32>
      %c0_17 = arith.constant 0 : index
      %c0_18 = arith.constant 0 : index
      %30 = vector.load %arg4[%c0_17, %c0_18] : memref<1x32xf32, #tpu.memory_space<vmem>>, vector<1x32xf32>
      %31 = vector.broadcast %30 : vector<1x32xf32> to vector<16x32xf32>
      %32 = arith.addf %29, %31 : vector<16x32xf32>
      %33 = arith.truncf %32 : vector<16x32xf32> to vector<16x32xbf16>
      %c0_19 = arith.constant 0 : index
      %c0_20 = arith.constant 0 : index
      %34 = vector.load %arg8[%c0_19, %c0_20] : memref<16x32xbf16, #tpu.memory_space<vmem>>, vector<16x32xbf16>
      tpu.vector_store %arg8[%c0_19, %c0_20], %33 {strides = array<i32>} : memref<16x32xbf16, #tpu.memory_space<vmem>>, vector<16x32xbf16>,
    } else {
    }
    %c0 = arith.constant 0 : index
    %c0_1 = arith.constant 0 : index
    %3 = vector.load %arg8[%c0, %c0_1] : memref<16x32xbf16, #tpu.memory_space<vmem>>, vector<16x32xbf16>
    %c0_2 = arith.constant 0 : index
    %c0_3 = arith.constant 0 : index
    %4 = vector.load %arg5[%c0_2, %c0_3] : memref<32x64xbf16, #tpu.memory_space<vmem>>, vector<32x64xbf16>
    %cst = arith.constant dense<0.000000e+00> : vector<16x64xf32>
    %5 = tpu.matmul %3, %4, %cst {dimension_numbers = #tpu.dot_dimension_numbers<[1], [0], [0], [1], [0, 0, 1, 1], [], []>} : vector<16x32xbf16>, vector<32x64xbf16>, vector<16x64xf32> -> vector<16x64xf32>
    %c0_4 = arith.constant 0 : index
    %c0_5 = arith.constant 0 : index
    %6 = vector.load %arg6[%c0_4, %c0_5] : memref<1x64xf32, #tpu.memory_space<vmem>>, vector<1x64xf32>
    %7 = vector.broadcast %6 : vector<1x64xf32> to vector<16x64xf32>
    %8 = arith.addf %5, %7 : vector<16x64xf32>
    %c0_6 = arith.constant 0 : index
    %c0_7 = arith.constant 0 : index
    %9 = vector.load %arg7[%c0_6, %c0_7] : memref<16x64xf32, #tpu.memory_space<vmem>>, vector<16x64xf32>
    tpu.vector_store %arg7[%c0_6, %c0_7], %8 {strides = array<i32>} : memref<16x64xf32, #tpu.memory_space<vmem>>, vector<16x64xf32>,
    return
  }
  func.func @transform_0(%arg0: i32, %arg1: i32) -> (i32, i32) {
    %c0_i32 = arith.constant 0 : i32
    %c0_i32_0 = arith.constant 0 : i32
    return %arg0, %c0_i32 : i32, i32
  }
  func.func @transform_1(%arg0: i32, %arg1: i32) -> (i32, i32) {
    %c0_i32 = arith.constant 0 : i32
    %c0_i32_0 = arith.constant 0 : i32
    %c0_i32_1 = arith.constant 0 : i32
    return %c0_i32, %c0_i32_0 : i32, i32
  }
  func.func @transform_2(%arg0: i32, %arg1: i32) -> (i32, i32) {
    %c0_i32 = arith.constant 0 : i32
    %c0_i32_0 = arith.constant 0 : i32
    %c0_i32_1 = arith.constant 0 : i32
    return %c0_i32, %c0_i32_0 : i32, i32
  }
  func.func @transform_3(%arg0: i32, %arg1: i32) -> (i32, i32) {
    %c0_i32 = arith.constant 0 : i32
    %c0_i32_0 = arith.constant 0 : i32
    return %c0_i32, %arg1 : i32, i32
  }
  func.func @transform_4(%arg0: i32, %arg1: i32) -> (i32, i32) {
    %c0_i32 = arith.constant 0 : i32
    %c0_i32_0 = arith.constant 0 : i32
    return %c0_i32, %arg1 : i32, i32
  }
  func.func @transform_5(%arg0: i32, %arg1: i32) -> (i32, i32) {
    %c0_i32 = arith.constant 0 : i32
    return %arg0, %arg1 : i32, i32
  }
}

module attributes {stable_mosaic.version = 11 : i64} {
  func.func @_attn_fenwick_kernel(%arg0: i32, %arg1: i32, %arg2: i32, %arg3: memref<1xi32, #tpu.memory_space<smem>>, %arg4: memref<1xi32, #tpu.memory_space<smem>>, %arg5: memref<1x8x8xbf16, #tpu.memory_space<vmem>>, %arg6: memref<1x8x8xbf16, #tpu.memory_space<vmem>>, %arg7: memref<1x8x8xbf16, #tpu.memory_space<vmem>>, %arg8: memref<1x8x8xbf16, #tpu.memory_space<vmem>>, %arg9: memref<8x1xf32, #tpu.memory_space<vmem>>, %arg10: memref<8x1xf32, #tpu.memory_space<vmem>>, %arg11: memref<8x8xf32, #tpu.memory_space<vmem>>) attributes {dimension_semantics = [#tpu.dimension_semantics<parallel>, #tpu.dimension_semantics<parallel>, #tpu.dimension_semantics<arbitrary>], iteration_bounds = array<i64: 8, 1, 1>, scalar_prefetch = 2 : i64, scratch_operands = 3 : i64, tpu.core_type = #tpu.core_type<tc>, window_params = [{transform_indices = @transform_0, window_bounds = array<i64: 1, 8, 8>}, {transform_indices = @transform_1, window_bounds = array<i64: 1, 8, 8>}, {transform_indices = @transform_2, window_bounds = array<i64: 1, 8, 8>}, {transform_indices = @transform_3, window_bounds = array<i64: 1, 8, 8>}]} {
    %0 = arith.index_cast %arg1 : i32 to index
    %1 = memref.load %arg4[%0] : memref<1xi32, #tpu.memory_space<smem>>
    %c0_i32 = arith.constant 0 : i32
    %2 = arith.cmpi eq, %arg2, %c0_i32 : i32
    %3 = arith.extui %2 : i1 to i32
    %c0_i32_0 = arith.constant 0 : i32
    %4 = arith.cmpi ne, %3, %c0_i32_0 : i32
    scf.if %4 {
      %cst = arith.constant -1.000000e+30 : f32
      %12 = vector.broadcast %cst : f32 to vector<8x1xf32>
      %c0 = arith.constant 0 : index
      %c0_3 = arith.constant 0 : index
      %13 = vector.load %arg9[%c0, %c0_3] : memref<8x1xf32, #tpu.memory_space<vmem>>, vector<8x1xf32>
      tpu.vector_store %arg9[%c0, %c0_3], %12 {strides = array<i32>} : memref<8x1xf32, #tpu.memory_space<vmem>>, vector<8x1xf32>,
      %cst_4 = arith.constant 0.000000e+00 : f32
      %14 = vector.broadcast %cst_4 : f32 to vector<8x1xf32>
      %c0_5 = arith.constant 0 : index
      %c0_6 = arith.constant 0 : index
      %15 = vector.load %arg10[%c0_5, %c0_6] : memref<8x1xf32, #tpu.memory_space<vmem>>, vector<8x1xf32>
      tpu.vector_store %arg10[%c0_5, %c0_6], %14 {strides = array<i32>} : memref<8x1xf32, #tpu.memory_space<vmem>>, vector<8x1xf32>,
      %cst_7 = arith.constant 0.000000e+00 : f32
      %16 = vector.broadcast %cst_7 : f32 to vector<8x8xf32>
      %c0_8 = arith.constant 0 : index
      %c0_9 = arith.constant 0 : index
      %17 = vector.load %arg11[%c0_8, %c0_9] : memref<8x8xf32, #tpu.memory_space<vmem>>, vector<8x8xf32>
      tpu.vector_store %arg11[%c0_8, %c0_9], %16 {strides = array<i32>} : memref<8x8xf32, #tpu.memory_space<vmem>>, vector<8x8xf32>,
    } else {
    }
    %5 = arith.cmpi slt, %arg2, %1 : i32
    %6 = arith.extui %5 : i1 to i32
    %c0_i32_1 = arith.constant 0 : i32
    %7 = arith.cmpi ne, %6, %c0_i32_1 : i32
    scf.if %7 {
      %c1_i32_3 = arith.constant 1 : i32
      %12 = arith.muli %arg1, %c1_i32_3 : i32
      %13 = arith.addi %12, %arg2 : i32
      %14 = arith.index_cast %13 : i32 to index
      %15 = memref.load %arg3[%14] : memref<1xi32, #tpu.memory_space<smem>>
      %c0 = arith.constant 0 : index
      %c0_4 = arith.constant 0 : index
      %c0_5 = arith.constant 0 : index
      %16 = vector.load %arg5[%c0, %c0_4, %c0_5] : memref<1x8x8xbf16, #tpu.memory_space<vmem>>, vector<1x8x8xbf16>
      %17 = vector.shape_cast %16 : vector<1x8x8xbf16> to vector<8x8xbf16>
      %c0_6 = arith.constant 0 : index
      %c0_7 = arith.constant 0 : index
      %c0_8 = arith.constant 0 : index
      %18 = vector.load %arg6[%c0_6, %c0_7, %c0_8] : memref<1x8x8xbf16, #tpu.memory_space<vmem>>, vector<1x8x8xbf16>
      %19 = vector.shape_cast %18 : vector<1x8x8xbf16> to vector<8x8xbf16>
      %cst = arith.constant dense<0.000000e+00> : vector<8x8xf32>
      %20 = tpu.matmul %17, %19, %cst {dimension_numbers = #tpu.dot_dimension_numbers<[1], [1], [0], [0], [0, 0, 1, 0], [], []>} : vector<8x8xbf16>, vector<8x8xbf16>, vector<8x8xf32> -> vector<8x8xf32>
      %c8_i32 = arith.constant 8 : i32
      %21 = arith.muli %arg1, %c8_i32 : i32
      %22 = tpu.iota {dimensions = array<i32: 0>} : vector<8x8xi32>
      %23 = vector.broadcast %21 : i32 to vector<8x8xi32>
      %24 = arith.addi %23, %22 : vector<8x8xi32>
      %c8_i32_9 = arith.constant 8 : i32
      %25 = arith.muli %15, %c8_i32_9 : i32
      %26 = tpu.iota {dimensions = array<i32: 1>} : vector<8x8xi32>
      %27 = vector.broadcast %25 : i32 to vector<8x8xi32>
      %28 = arith.addi %27, %26 : vector<8x8xi32>
      %29 = arith.subi %24, %28 : vector<8x8xi32>
      %c0_i32_10 = arith.constant 0 : i32
      %30 = vector.broadcast %c0_i32_10 : i32 to vector<8x8xi32>
      %31 = arith.cmpi eq, %29, %30 : vector<8x8xi32>
      %c0_i32_11 = arith.constant 0 : i32
      %32 = vector.broadcast %c0_i32_11 : i32 to vector<8x8xi32>
      %33 = arith.cmpi sgt, %29, %32 : vector<8x8xi32>
      %c1_i32_12 = arith.constant 1 : i32
      %34 = vector.broadcast %c1_i32_12 : i32 to vector<8x8xi32>
      %35 = arith.subi %29, %34 : vector<8x8xi32>
      %36 = arith.andi %29, %35 : vector<8x8xi32>
      %c0_i32_13 = arith.constant 0 : i32
      %37 = vector.broadcast %c0_i32_13 : i32 to vector<8x8xi32>
      %38 = arith.cmpi eq, %36, %37 : vector<8x8xi32>
      %39 = arith.andi %33, %38 : vector<8x8xi1>
      %40 = arith.ori %31, %39 : vector<8x8xi1>
      %cst_14 = arith.constant -1.000000e+30 : f32
      %41 = vector.broadcast %cst_14 : f32 to vector<8x8xf32>
      %42 = arith.select %40, %20, %41 : vector<8x8xi1>, vector<8x8xf32>
      %c0_15 = arith.constant 0 : index
      %c0_16 = arith.constant 0 : index
      %c0_17 = arith.constant 0 : index
      %43 = vector.load %arg7[%c0_15, %c0_16, %c0_17] : memref<1x8x8xbf16, #tpu.memory_space<vmem>>, vector<1x8x8xbf16>
      %44 = vector.shape_cast %43 : vector<1x8x8xbf16> to vector<8x8xbf16>
      %c0_18 = arith.constant 0 : index
      %c0_19 = arith.constant 0 : index
      %45 = vector.load %arg9[%c0_18, %c0_19] : memref<8x1xf32, #tpu.memory_space<vmem>>, vector<8x1xf32>
      %cst_20 = arith.constant dense<0xFF800000> : vector<8xf32>
      %46 = vector.multi_reduction <maximumf>, %42, %cst_20 [1] : vector<8x8xf32> to vector<8xf32>
      %47 = vector.shape_cast %46 : vector<8xf32> to vector<8x1xf32>
      %48 = arith.maximumf %45, %47 : vector<8x1xf32>
      %49 = arith.subf %45, %48 : vector<8x1xf32>
      %50 = math.exp %49 : vector<8x1xf32>
      %51 = vector.broadcast %48 : vector<8x1xf32> to vector<8x8xf32>
      %52 = arith.subf %42, %51 : vector<8x8xf32>
      %53 = math.exp %52 : vector<8x8xf32>
      %c0_21 = arith.constant 0 : index
      %c0_22 = arith.constant 0 : index
      %54 = vector.load %arg10[%c0_21, %c0_22] : memref<8x1xf32, #tpu.memory_space<vmem>>, vector<8x1xf32>
      %55 = arith.mulf %50, %54 : vector<8x1xf32>
      %cst_23 = arith.constant dense<0.000000e+00> : vector<8xf32>
      %56 = vector.multi_reduction <add>, %53, %cst_23 [1] : vector<8x8xf32> to vector<8xf32>
      %57 = vector.shape_cast %56 : vector<8xf32> to vector<8x1xf32>
      %58 = arith.addf %55, %57 : vector<8x1xf32>
      %c0_24 = arith.constant 0 : index
      %c0_25 = arith.constant 0 : index
      %59 = vector.load %arg10[%c0_24, %c0_25] : memref<8x1xf32, #tpu.memory_space<vmem>>, vector<8x1xf32>
      tpu.vector_store %arg10[%c0_24, %c0_25], %58 {strides = array<i32>} : memref<8x1xf32, #tpu.memory_space<vmem>>, vector<8x1xf32>,
      %c0_26 = arith.constant 0 : index
      %c0_27 = arith.constant 0 : index
      %60 = vector.load %arg11[%c0_26, %c0_27] : memref<8x8xf32, #tpu.memory_space<vmem>>, vector<8x8xf32>
      %61 = vector.broadcast %50 : vector<8x1xf32> to vector<8x8xf32>
      %62 = arith.mulf %61, %60 : vector<8x8xf32>
      %63 = arith.truncf %53 : vector<8x8xf32> to vector<8x8xbf16>
      %cst_28 = arith.constant dense<0.000000e+00> : vector<8x8xf32>
      %64 = tpu.matmul %63, %44, %cst_28 {dimension_numbers = #tpu.dot_dimension_numbers<[1], [0], [0], [1], [0, 0, 1, 1], [], []>} : vector<8x8xbf16>, vector<8x8xbf16>, vector<8x8xf32> -> vector<8x8xf32>
      %65 = arith.addf %62, %64 : vector<8x8xf32>
      %c0_29 = arith.constant 0 : index
      %c0_30 = arith.constant 0 : index
      %66 = vector.load %arg11[%c0_29, %c0_30] : memref<8x8xf32, #tpu.memory_space<vmem>>, vector<8x8xf32>
      tpu.vector_store %arg11[%c0_29, %c0_30], %65 {strides = array<i32>} : memref<8x8xf32, #tpu.memory_space<vmem>>, vector<8x8xf32>,
      %c0_31 = arith.constant 0 : index
      %c0_32 = arith.constant 0 : index
      %67 = vector.load %arg9[%c0_31, %c0_32] : memref<8x1xf32, #tpu.memory_space<vmem>>, vector<8x1xf32>
      tpu.vector_store %arg9[%c0_31, %c0_32], %48 {strides = array<i32>} : memref<8x1xf32, #tpu.memory_space<vmem>>, vector<8x1xf32>,
    } else {
    }
    %c1_i32 = arith.constant 1 : i32
    %8 = arith.subi %1, %c1_i32 : i32
    %9 = arith.cmpi eq, %arg2, %8 : i32
    %10 = arith.extui %9 : i1 to i32
    %c0_i32_2 = arith.constant 0 : i32
    %11 = arith.cmpi ne, %10, %c0_i32_2 : i32
    scf.if %11 {
      %c0 = arith.constant 0 : index
      %c0_3 = arith.constant 0 : index
      %12 = vector.load %arg11[%c0, %c0_3] : memref<8x8xf32, #tpu.memory_space<vmem>>, vector<8x8xf32>
      %c0_4 = arith.constant 0 : index
      %c0_5 = arith.constant 0 : index
      %13 = vector.load %arg10[%c0_4, %c0_5] : memref<8x1xf32, #tpu.memory_space<vmem>>, vector<8x1xf32>
      %14 = tpu.reciprocal %13 {approx = true} : vector<8x1xf32> -> vector<8x1xf32>
      %15 = vector.broadcast %14 : vector<8x1xf32> to vector<8x8xf32>
      %16 = arith.mulf %12, %15 : vector<8x8xf32>
      %17 = arith.truncf %16 : vector<8x8xf32> to vector<8x8xbf16>
      %c0_6 = arith.constant 0 : index
      %c0_7 = arith.constant 0 : index
      %c0_8 = arith.constant 0 : index
      %18 = vector.load %arg8[%c0_6, %c0_7, %c0_8] : memref<1x8x8xbf16, #tpu.memory_space<vmem>>, vector<1x8x8xbf16>
      %19 = vector.shape_cast %18 : vector<1x8x8xbf16> to vector<8x8xbf16>
      %20 = vector.shape_cast %17 : vector<8x8xbf16> to vector<1x8x8xbf16>
      tpu.vector_store %arg8[%c0_6, %c0_7, %c0_8], %20 {strides = array<i32>} : memref<1x8x8xbf16, #tpu.memory_space<vmem>>, vector<1x8x8xbf16>,
    } else {
    }
    return
  }
  func.func @transform_0(%arg0: i32, %arg1: i32, %arg2: i32, %arg3: memref<1xi32, #tpu.memory_space<smem>>, %arg4: memref<1xi32, #tpu.memory_space<smem>>) -> (i32, i32, i32) {
    %c0_i32 = arith.constant 0 : i32
    %c0_i32_0 = arith.constant 0 : i32
    return %arg0, %arg1, %c0_i32 : i32, i32, i32
  }
  func.func @transform_1(%arg0: i32, %arg1: i32, %arg2: i32, %arg3: memref<1xi32, #tpu.memory_space<smem>>, %arg4: memref<1xi32, #tpu.memory_space<smem>>) -> (i32, i32, i32) {
    %c8_i32 = arith.constant 8 : i32
    %0 = arith.addi %c8_i32, %arg0 : i32
    %c1_i32 = arith.constant 1 : i32
    %1 = arith.muli %arg1, %c1_i32 : i32
    %2 = arith.addi %1, %arg2 : i32
    %3 = arith.index_cast %2 : i32 to index
    %4 = memref.load %arg3[%3] : memref<1xi32, #tpu.memory_space<smem>>
    %c0_i32 = arith.constant 0 : i32
    %c0_i32_0 = arith.constant 0 : i32
    return %0, %4, %c0_i32 : i32, i32, i32
  }
  func.func @transform_2(%arg0: i32, %arg1: i32, %arg2: i32, %arg3: memref<1xi32, #tpu.memory_space<smem>>, %arg4: memref<1xi32, #tpu.memory_space<smem>>) -> (i32, i32, i32) {
    %c16_i32 = arith.constant 16 : i32
    %0 = arith.addi %c16_i32, %arg0 : i32
    %c1_i32 = arith.constant 1 : i32
    %1 = arith.muli %arg1, %c1_i32 : i32
    %2 = arith.addi %1, %arg2 : i32
    %3 = arith.index_cast %2 : i32 to index
    %4 = memref.load %arg3[%3] : memref<1xi32, #tpu.memory_space<smem>>
    %c0_i32 = arith.constant 0 : i32
    %c0_i32_0 = arith.constant 0 : i32
    return %0, %4, %c0_i32 : i32, i32, i32
  }
  func.func @transform_3(%arg0: i32, %arg1: i32, %arg2: i32, %arg3: memref<1xi32, #tpu.memory_space<smem>>, %arg4: memref<1xi32, #tpu.memory_space<smem>>) -> (i32, i32, i32) {
    %c0_i32 = arith.constant 0 : i32
    %c0_i32_0 = arith.constant 0 : i32
    return %arg0, %arg1, %c0_i32 : i32, i32, i32
  }
}

</mosaic_0001>

<llo_original>
// kernel: forward.12
$region0: #{forward.12}
  #allocation0 [shape = 'u32[]', space=smem, size = 0x4, offset = 0x4, fixed_abs, tag = 'smem constant byte address 0x4 - core index']
  #allocation1 [shape = 'u32[72,128]{1,0:T(1,128)}', space=vmem, size = 0x9000, scoped, tag = 'internal scratch']
  #allocation2 [shape = 'f32[8,1]{1,0:T(8,128)}', space=vmem, size = 0x1000, scoped, tag = 'scratch operand']
  #allocation3 [shape = 'f32[8,1]{1,0:T(8,128)}', space=vmem, size = 0x1000, scoped, tag = 'scratch operand']
  #allocation4 [shape = 'f32[8,8]{1,0:T(8,128)}', space=vmem, size = 0x1000, scoped, tag = 'scratch operand']
  %s0 = inlined_call_operand.vmem [shape: bf16[24,8,8], index: 0, kind: input, shape index: {}, may-alias: {0,1,2}]
  %s1 = inlined_call_operand.vmem [shape: bf16[24,8,8], index: 1, kind: input, shape index: {}, may-alias: {0,1,2}]
  %s2 = inlined_call_operand.vmem [shape: bf16[24,8,8], index: 2, kind: input, shape index: {}, may-alias: {0,1,2}]
  %s3 = inlined_call_operand.vmem [shape: bf16[8,8,8], index: 3, kind: output, shape index: {}]
  %s4 = sld [smem:[#allocation0]]
  $region53: #{forward.12} parent=0
    _
  %s6 = ssub.s32 1, %s4
  %s7 = scalar_select 0, %s6, %s4
  loop: start=0, step=1, limit=10
  $region2: #{forward.12} parent=0 // loop_pre_header
    _
  $region3: #{forward.12} parent=0 // loop_header
    %s9 = sphi 0, %s13
    %p10 = scmp.ge.s32.totalorder %s9, 10
    %s16 = sphi 0, %s35
    %s17 = sphi 0, %s31
    %s18 = sphi 0, %s27
    %s19 = sphi 0, %s16
    %s20 = sphi 0, %s17
    %s21 = sphi 0, %s18
    %s22 = sphi 0, %s19
    %s23 = sphi 0, %s20
    %s24 = sphi 0, %s21
    %s40 = sphi 0, %s42
    %s43 = sphi 0, %s40
    %s44 = sphi 0, %s43
    %s60 = sphi 0, %s44
    %s70 = sphi 0, %s72
    %s73 = sphi 0, %s70
    %s74 = sphi 0, %s73
    %s90 = sphi 0, %s74
    %s100 = sphi 0, %s102
    %s103 = sphi 0, %s100
    %s104 = sphi 0, %s103
    %s120 = sphi 0, %s104
    %s128 = sphi 0, %s130
    %s131 = sphi 0, %s128
    %s132 = sphi 0, %s131
    %s148 = sphi 0, %s132
  $region4: #{forward.12} parent=0 // loop_header_branch
    %12 = sbr.rel (%p10) target = $region8
  $region5: #{forward.12} parent=0 // loop_body
    %s14 = ssub.s32 %s9, 1
    %s15 = ssub.s32 %s9, 2
    %s25 = sadd.s32 1, %s18
    %p26 = scmp.ge.s32.totalorder %s25, 1
    %s27 = scalar_select %p26, 0, %s25
    %s28 = sadd.s32 1, %s17
    %s29 = scalar_select %p26, %s28, %s17
    %p30 = scmp.ge.s32.totalorder %s29, 1
    %s31 = scalar_select %p30, 0, %s29
    %s32 = sadd.s32 1, %s16
    %s33 = scalar_select %p30, %s32, %s16
    %p34 = scmp.ge.s32.totalorder %s33, 8
    %s35 = scalar_select %p34, 0, %s33
    %s36 = ssub.s32 %s16, %s35
    %s37 = ssub.s32 %s17, %s31
    %s38 = sor.u32 %s36, %s37
    %p39 = scmp.eq.s32.totalorder %s38, 0
    %s41 = sadd.s32 %s40, 1
    %s42 = scalar_select %p39, %s40, %s41
    %p45 = pneg %p39
    %p46 = scmp.eq.s32.totalorder %s9, 7
    %p47 = por %p45, %p46
    %p48 = scmp.ne.s32.totalorder %s40, %s43
    %p49 = scmp.eq.s32.totalorder %s9, 0
    %p50 = por %p48, %p49
    %p51 = scmp.ne.s32.totalorder %s40, %s43
    %p52 = scmp.eq.s32.totalorder %s14, 7
    %p53 = por %p51, %p52
    %p54 = scmp.ne.s32.totalorder %s43, %s44
    %p55 = scmp.eq.s32.totalorder %s14, 0
    %p56 = por %p54, %p55
    %p57 = scmp.ne.s32.totalorder %s43, %s44
    %p58 = scmp.eq.s32.totalorder %s15, 7
    %p59 = por %p57, %p58
    %p61 = scmp.ne.s32.totalorder %s44, %s60
    %p62 = scmp.eq.s32.totalorder %s15, 0
    %p63 = por %p61, %p62
    %s64 = sadd.s32 %s16, 8
    %s65 = sadd.s32 %s35, 8
    %s66 = ssub.s32 %s64, %s65
    %s67 = ssub.s32 %s18, %s27
    %s68 = sor.u32 %s66, %s67
    %p69 = scmp.eq.s32.totalorder %s68, 0
    %s71 = sadd.s32 %s70, 1
    %s72 = scalar_select %p69, %s70, %s71
    %p75 = pneg %p69
    %p76 = scmp.eq.s32.totalorder %s9, 7
    %p77 = por %p75, %p76
    %p78 = scmp.ne.s32.totalorder %s70, %s73
    %p79 = scmp.eq.s32.totalorder %s9, 0
    %p80 = por %p78, %p79
    %p81 = scmp.ne.s32.totalorder %s70, %s73
    %p82 = scmp.eq.s32.totalorder %s14, 7
    %p83 = por %p81, %p82
    %p84 = scmp.ne.s32.totalorder %s73, %s74
    %p85 = scmp.eq.s32.totalorder %s14, 0
    %p86 = por %p84, %p85
    %p87 = scmp.ne.s32.totalorder %s73, %s74
    %p88 = scmp.eq.s32.totalorder %s15, 7
    %p89 = por %p87, %p88
    %p91 = scmp.ne.s32.totalorder %s74, %s90
    %p92 = scmp.eq.s32.totalorder %s15, 0
    %p93 = por %p91, %p92
    %s94 = sadd.s32 %s16, 16
    %s95 = sadd.s32 %s35, 16
    %s96 = ssub.s32 %s94, %s95
    %s97 = ssub.s32 %s18, %s27
    %s98 = sor.u32 %s96, %s97
    %p99 = scmp.eq.s32.totalorder %s98, 0
    %s101 = sadd.s32 %s100, 1
    %s102 = scalar_select %p99, %s100, %s101
    %p105 = pneg %p99
    %p106 = scmp.eq.s32.totalorder %s9, 7
    %p107 = por %p105, %p106
    %p108 = scmp.ne.s32.totalorder %s100, %s103
    %p109 = scmp.eq.s32.totalorder %s9, 0
    %p110 = por %p108, %p109
    %p111 = scmp.ne.s32.totalorder %s100, %s103
    %p112 = scmp.eq.s32.totalorder %s14, 7
    %p113 = por %p111, %p112
    %p114 = scmp.ne.s32.totalorder %s103, %s104
    %p115 = scmp.eq.s32.totalorder %s14, 0
    %p116 = por %p114, %p115
    %p117 = scmp.ne.s32.totalorder %s103, %s104
    %p118 = scmp.eq.s32.totalorder %s15, 7
    %p119 = por %p117, %p118
    %p121 = scmp.ne.s32.totalorder %s104, %s120
    %p122 = scmp.eq.s32.totalorder %s15, 0
    %p123 = por %p121, %p122
    %s124 = ssub.s32 %s16, %s35
    %s125 = ssub.s32 %s17, %s31
    %s126 = sor.u32 %s124, %s125
    %p127 = scmp.eq.s32.totalorder %s126, 0
    %s129 = sadd.s32 %s128, 1
    %s130 = scalar_select %p127, %s128, %s129
    %p133 = pneg %p127
    %p134 = scmp.eq.s32.totalorder %s9, 7
    %p135 = por %p133, %p134
    %p136 = scmp.ne.s32.totalorder %s128, %s131
    %p137 = scmp.eq.s32.totalorder %s9, 0
    %p138 = por %p136, %p137
    %p139 = scmp.ne.s32.totalorder %s128, %s131
    %p140 = scmp.eq.s32.totalorder %s14, 7
    %p141 = por %p139, %p140
    %p142 = scmp.ne.s32.totalorder %s131, %s132
    %p143 = scmp.eq.s32.totalorder %s14, 0
    %p144 = por %p142, %p143
    %p145 = scmp.ne.s32.totalorder %s131, %s132
    %p146 = scmp.eq.s32.totalorder %s15, 7
    %p147 = por %p145, %p146
    %p149 = scmp.ne.s32.totalorder %s132, %s148
    %p150 = scmp.eq.s32.totalorder %s15, 0
    %p151 = por %p149, %p150
    %p152 = scmp.le.s32.totalorder 1, %s9
    %p153 = scmp.lt.s32.totalorder %s9, 9
    %p154 = pnand %p152, %p153
    %p155 = pneg %p154
    // Predicated region
    $region9: #{forward.12} parent=5 // pred_check
      _
    $region10: #{forward.12} parent=5 // pred_check_branch
      %157 = sbr.rel (%p154) target = $region12
    $region11: #{forward.12} parent=5 // pred_region
      %s158 = ssub.s32 %s9, 1
    $region12: #{forward.12} parent=5 // pred_fallthru
      _
    %p159 = scmp.lt.s32.totalorder %s9, 8
    // Predicated region
    $region13: #{forward.12} parent=5 // pred_check
      %p160 = pneg %p159
    $region14: #{forward.12} parent=5 // pred_check_branch
      %162 = sbr.rel (%p160) target = $region16
    $region15: #{forward.12} parent=5 // pred_region
      // Predicated region
      $region17: #{forward.12} parent=15 // pred_check
        %p163 = pneg %p50
      $region18: #{forward.12} parent=15 // pred_check_branch
        %165 = sbr.rel (%p163) target = $region20
      $region19: #{forward.12} parent=15 // pred_region
        %p166 = scmp.lt.s32.totalorder %s16, 23
        %s167 = scalar_select %p166, %s16, 23
        %p168 = scmp.lt.s32.totalorder %s17, 0
        %s169 = scalar_select %p168, %s17, 0
        %s170 = sadd.s32 %s169, %s167
        %s171 = smul.addr %s170, 4
        %s172 = scalar_lea.vmem %s0, %s171
      $region20: #{forward.12} parent=15 // pred_fallthru
        _
      // Predicated region
      $region21: #{forward.12} parent=15 // pred_check
        %p173 = pneg %p80
      $region22: #{forward.12} parent=15 // pred_check_branch
        %175 = sbr.rel (%p173) target = $region24
      $region23: #{forward.12} parent=15 // pred_region
        %s176 = sadd.s32 %s16, 8
        %p177 = scmp.lt.s32.totalorder %s176, 23
        %s178 = scalar_select %p177, %s176, 23
        %p179 = scmp.lt.s32.totalorder %s18, 0
        %s180 = scalar_select %p179, %s18, 0
        %s181 = sadd.s32 %s180, %s178
        %s182 = smul.addr %s181, 4
        %s183 = scalar_lea.vmem %s1, %s182
        %s184 = sadd.s32 %s16, 8
      $region24: #{forward.12} parent=15 // pred_fallthru
        _
      // Predicated region
      $region25: #{forward.12} parent=15 // pred_check
        %p185 = pneg %p110
      $region26: #{forward.12} parent=15 // pred_check_branch
        %187 = sbr.rel (%p185) target = $region28
      $region27: #{forward.12} parent=15 // pred_region
        %s188 = sadd.s32 %s16, 16
        %p189 = scmp.lt.s32.totalorder %s188, 23
        %s190 = scalar_select %p189, %s188, 23
        %p191 = scmp.lt.s32.totalorder %s18, 0
        %s192 = scalar_select %p191, %s18, 0
        %s193 = sadd.s32 %s192, %s190
        %s194 = smul.addr %s193, 4
        %s195 = scalar_lea.vmem %s2, %s194
        %s196 = sadd.s32 %s16, 16
      $region28: #{forward.12} parent=15 // pred_fallthru
        _
    $region16: #{forward.12} parent=5 // pred_fallthru
      _
    %p197 = scmp.le.s32.totalorder 1, %s9
    %p198 = scmp.lt.s32.totalorder %s9, 9
    %p199 = pnand %p197, %p198
    %p200 = pneg %p199
    // Predicated region
    $region29: #{forward.12} parent=5 // pred_check
      _
    $region30: #{forward.12} parent=5 // pred_check_branch
      %202 = sbr.rel (%p199) target = $region32
    $region31: #{forward.12} parent=5 // pred_region
      %s203 = ssub.s32 %s9, 1
      %p204 = scmp.lt.s32.totalorder %s19, 23
      %s205 = scalar_select %p204, %s19, 23
      %p206 = scmp.lt.s32.totalorder %s20, 0
      %s207 = scalar_select %p206, %s20, 0
      %s208 = sadd.s32 %s207, %s205
      %s209 = smul.addr %s208, 4
      %s210 = scalar_lea.vmem %s0, %s209
      %p211 = pneg %p56
      %p212 = pneg %p53
      %s213 = sadd.s32 %s19, 8
      %p214 = scmp.lt.s32.totalorder %s213, 23
      %s215 = scalar_select %p214, %s213, 23
      %p216 = scmp.lt.s32.totalorder %s21, 0
      %s217 = scalar_select %p216, %s21, 0
      %s218 = sadd.s32 %s217, %s215
      %s219 = smul.addr %s218, 4
      %s220 = scalar_lea.vmem %s1, %s219
      %p221 = pneg %p86
      %p222 = pneg %p83
      %s223 = sadd.s32 %s19, 16
      %p224 = scmp.lt.s32.totalorder %s223, 23
      %s225 = scalar_select %p224, %s223, 23
      %p226 = scmp.lt.s32.totalorder %s21, 0
      %s227 = scalar_select %p226, %s21, 0
      %s228 = sadd.s32 %s227, %s225
      %s229 = smul.addr %s228, 4
      %s230 = scalar_lea.vmem %s2, %s229
      %p231 = pneg %p116
      %p232 = pneg %p113
      %p233 = pneg %p144
      %p234 = pneg %p141
      %p235 = scmp.lt.s32.totalorder %s19, 7
      %s236 = scalar_select %p235, %s19, 7
      %p237 = scmp.lt.s32.totalorder %s20, 0
      %s238 = scalar_select %p237, %s20, 0
      %s239 = sadd.s32 %s238, %s236
      %s240 = smul.addr %s239, 4
      %s241 = scalar_lea.vmem %s3, %s240
      %p242 = scmp.lt.s32.totalorder %s19, 23
      %s243 = scalar_select %p242, %s19, 23
      %p244 = scmp.lt.s32.totalorder %s20, 0
      %s245 = scalar_select %p244, %s20, 0
      %s246 = sadd.s32 %s245, %s243
      %s247 = smul.addr %s246, 4
      %s248 = scalar_lea.vmem %s0, %s247
      %s249 = sadd.s32 %s19, 8
      %p250 = scmp.lt.s32.totalorder %s249, 23
      %s251 = scalar_select %p250, %s249, 23
      %p252 = scmp.lt.s32.totalorder %s21, 0
      %s253 = scalar_select %p252, %s21, 0
      %s254 = sadd.s32 %s253, %s251
      %s255 = smul.addr %s254, 4
      %s256 = scalar_lea.vmem %s1, %s255
      %s257 = sadd.s32 %s19, 8
      %s258 = sadd.s32 %s19, 16
      %p259 = scmp.lt.s32.totalorder %s258, 23
      %s260 = scalar_select %p259, %s258, 23
      %p261 = scmp.lt.s32.totalorder %s21, 0
      %s262 = scalar_select %p261, %s21, 0
      %s263 = sadd.s32 %s262, %s260
      %s264 = smul.addr %s263, 4
      %s265 = scalar_lea.vmem %s2, %s264
      %s266 = sadd.s32 %s19, 16
      %p267 = scmp.lt.s32.totalorder %s19, 7
      %s268 = scalar_select %p267, %s19, 7
      %p269 = scmp.lt.s32.totalorder %s20, 0
      %s270 = scalar_select %p269, %s20, 0
      %s271 = sadd.s32 %s270, %s268
      %s272 = smul.addr %s271, 4
      %s273 = scalar_lea.vmem %s3, %s272
      %p275 = scmp.eq.s32.totalorder %s21, 0
      // Predicated region
      $region33: #{forward.12} parent=31 // pred_check
        %p276 = pneg %p275
      $region34: #{forward.12} parent=31 // pred_check_branch
        %278 = sbr.rel (%p276) target = $region36
      $region35: #{forward.12} parent=31 // pred_region
        %vm279 = vcmask 7168
        %280 = vst.msk [vmem:[#allocation2] sm:$0xff] %vm279, -1e+30
        %281 = vst.msk [vmem:[#allocation3] sm:$0xff] %vm279, 0.0
        %vm282 = vcmask 64512
        %283 = vst.msk [vmem:[#allocation4] sm:$0xff] %vm282, 0.0
      $region36: #{forward.12} parent=31 // pred_fallthru
        _
      %v284 = vld [vmem:[%s248] sm:$0xf]
      %v285 = vld [vmem:[%s256] sm:$0xf]
      %vm286 = vcmask 64512
      %v288 = vsel %vm286, %v284, 0
      %v291 = vsel %vm286, %v285, 0
      %293 = vmatpush.bf16.xpose.msra.mxu0 0
      %294 = vmatpush.bf16.xpose.msra.mxu0 0
      %295 = vmatpush.bf16.xpose.msra.mxu0 0
      %296 = vmatpush.bf16.xpose.msra.mxu0 0
      %297 = vmatpush.bf16.xpose.msra.mxu0 0
      %298 = vmatpush.bf16.xpose.msra.mxu0 0
      %299 = vmatpush.bf16.xpose.msra.mxu0 0
      %300 = vmatpush.bf16.xpose.msra.mxu0 %v291
      %301 = vmatmul.bf16.gmra.mxu0 %v288
      %v302 = vpop.f32.mrf.mxu0
      %v303 = vadd.f32 0.0, %v302
      %v304 = vpop.f32.mrf.mxu0
      %305 = vdwg.mxu0
      %v306 = vld [vmem:[%s265] sm:$0xf]
      %v307 = vld [vmem:[#allocation2] sm:$0xff]
      %v308 = vsel %vm286, %v303, -inf
      %309 = vmax.xlane.f32.xlu0 %v308
      %v310 = vpop.xlane.xlu0 %309
      %v311 = vmax.f32 %v307, %v310
      %v312 = vsub.f32 %v307, %v311
      %v313 = vmul.f32 %v312, 1.442695
      %v314 = vpow.pop %v313
      %316 = vset.pattern.permute.xlu0 0
      %317 = vperm.xlu0 %316, %v311
      %v318 = vpop.permute.xlu0 %317
      %v320 = vsub.f32 %v303, %v318
      %v321 = vmul.f32 %v320, 1.442695
      %v322 = vpow.pop %v321
      %v323 = vld [vmem:[#allocation3] sm:$0xff]
      %v324 = vmul.f32 %v314, %v323
      %v325 = vsel %vm286, %v322, 0.0
      %326 = vadd.xlane.f32.xlu0 %v325
      %v327 = vpop.xlane.xlu0 %326
      %v328 = vadd.f32 %v324, %v327
      %vm329 = vcmask 7168
      %330 = vst.msk [vmem:[#allocation3] sm:$0xff] %vm329, %v328
      %v331 = vld [vmem:[#allocation4] sm:$0xff]
      %333 = vset.pattern.permute.xlu0 0
      %334 = vperm.xlu0 %333, %v314
      %v335 = vpop.permute.xlu0 %334
      %v337 = vmul.f32 %v335, %v331
      %v338 = vpack.c.bf16 %v322, %v322
      %v340 = vsel %vm286, %v338, 0
      %vm342 = vcmask 1043456
      %v344 = vsel %vm342, %v306, 0
      %346 = vmatpush.bf16.msra.mxu0 0
      %347 = vmatpush.bf16.msra.mxu0 0
      %348 = vmatpush.bf16.msra.mxu0 0
      %349 = vmatpush.bf16.msra.mxu0 0
      %350 = vmatpush.bf16.msra.mxu0 0
      %351 = vmatpush.bf16.msra.mxu0 0
      %352 = vmatpush.bf16.msra.mxu0 0
      %353 = vmatpush.bf16.msra.mxu0 %v344
      %354 = vmatmul.bf16.gmra.mxu0 %v340
      %v355 = vpop.f32.mrf.mxu0
      %v356 = vadd.f32 0.0, %v355
      %v357 = vpop.f32.mrf.mxu0
      %358 = vdwg.mxu0
      %v359 = vadd.f32 %v337, %v356
      %360 = vst.msk [vmem:[#allocation4] sm:$0xff] %vm286, %v359
      %361 = vst.msk [vmem:[#allocation2] sm:$0xff] %vm329, %v311
      // Predicated region
      $region37: #{forward.12} parent=31 // pred_check
        %p362 = pneg %p275
      $region38: #{forward.12} parent=31 // pred_check_branch
        %364 = sbr.rel (%p362) target = $region40
      $region39: #{forward.12} parent=31 // pred_region
        %v365 = vld [vmem:[#allocation4] sm:$0xff]
        %v366 = vld [vmem:[#allocation3] sm:$0xff]
        %v367 = vrcp.pop %v366
        %369 = vset.pattern.permute.xlu0 0
        %370 = vperm.xlu0 %369, %v367
        %v371 = vpop.permute.xlu0 %370
        %v373 = vmul.f32 %v365, %v371
        %v374 = vpack.c.bf16 %v373, %v373
        %vm375 = vcmask 60416
        %376 = vst.msk [vmem:[%s273] sm:$0xf] %vm375, %v374
      $region40: #{forward.12} parent=31 // pred_fallthru
        _
      %p377 = scmp.lt.s32.totalorder %s19, 7
      %s378 = scalar_select %p377, %s19, 7
      %p379 = scmp.lt.s32.totalorder %s20, 0
      %s380 = scalar_select %p379, %s20, 0
      %s381 = sadd.s32 %s380, %s378
      %s382 = smul.addr %s381, 4
      %s383 = scalar_lea.vmem %s3, %s382
      // Predicated region
      $region41: #{forward.12} parent=31 // pred_check
        %p384 = pneg %p141
      $region42: #{forward.12} parent=31 // pred_check_branch
        %386 = sbr.rel (%p384) target = $region44
      $region43: #{forward.12} parent=31 // pred_region
        _
      $region44: #{forward.12} parent=31 // pred_fallthru
        _
    $region32: #{forward.12} parent=5 // pred_fallthru
      _
    %p387 = scmp.le.s32.totalorder 2, %s9
    // Predicated region
    $region45: #{forward.12} parent=5 // pred_check
      %p388 = pneg %p387
    $region46: #{forward.12} parent=5 // pred_check_branch
      %390 = sbr.rel (%p388) target = $region48
    $region47: #{forward.12} parent=5 // pred_region
      %s391 = ssub.s32 %s9, 2
      // Predicated region
      $region49: #{forward.12} parent=47 // pred_check
        %p392 = pneg %p147
      $region50: #{forward.12} parent=47 // pred_check_branch
        %394 = sbr.rel (%p392) target = $region52
      $region51: #{forward.12} parent=47 // pred_region
        %p395 = scmp.lt.s32.totalorder %s22, 7
        %s396 = scalar_select %p395, %s22, 7
        %p397 = scmp.lt.s32.totalorder %s23, 0
        %s398 = scalar_select %p397, %s23, 0
        %s399 = sadd.s32 %s398, %s396
        %s400 = smul.addr %s399, 4
        %s401 = scalar_lea.vmem %s3, %s400
      $region52: #{forward.12} parent=47 // pred_fallthru
        _
    $region48: #{forward.12} parent=5 // pred_fallthru
      _
  $region6: #{forward.12} parent=0 // loop_footer
    %s13 = sadd.s32 1, %s9
  $region7: #{forward.12} parent=0 // loop_footer_branch
    %8 = sbr.rel target = $region3
  $region8: #{forward.12} parent=0 // loop_exit
    _

// kernel: forward.13
$region0: #{forward.13}
  #allocation0 [shape = 'u32[]', space=smem, size = 0x4, offset = 0x4, fixed_abs, tag = 'smem constant byte address 0x4 - core index']
  #allocation1 [shape = 'u32[72,128]{1,0:T(1,128)}', space=vmem, size = 0x9000, scoped, tag = 'internal scratch']
  #allocation2 [shape = 'f32[16,32]{1,0:T(8,128)}', space=vmem, size = 0x2000, scoped, tag = 'scratch operand']
  %s0 = inlined_call_operand.vmem [shape: bf16[16,32], index: 0, kind: input, shape index: {}]
  %s1 = inlined_call_operand.vmem [shape: bf16[32,32], index: 1, kind: input, shape index: {}]
  %s2 = inlined_call_operand.vmem [shape: f32[1,32], index: 2, kind: input, shape index: {}]
  %s3 = inlined_call_operand.vmem [shape: f32[16,32], index: 3, kind: input, shape index: {}]
  %s4 = inlined_call_operand.vmem [shape: f32[16,32], index: 4, kind: output, shape index: {}]
  %s5 = sld [smem:[#allocation0]]
  $region34: #{forward.13} parent=0
    _
  %s7 = ssub.s32 1, %s5
  %s8 = scalar_select 0, %s7, %s5
  // Predicated region
  $region2: #{forward.13} parent=0 // pred_check
    _
  $region3: #{forward.13} parent=0 // pred_check_branch
    %10 = sbr.rel (0) target = $region5
  $region4: #{forward.13} parent=0 // pred_region
    _
  $region5: #{forward.13} parent=0 // pred_fallthru
    _
  // Predicated region
  $region6: #{forward.13} parent=0 // pred_check
    _
  $region7: #{forward.13} parent=0 // pred_check_branch
    %12 = sbr.rel (0) target = $region9
  $region8: #{forward.13} parent=0 // pred_region
    _
  $region9: #{forward.13} parent=0 // pred_fallthru
    _
  // Predicated region
  $region10: #{forward.13} parent=0 // pred_check
    _
  $region11: #{forward.13} parent=0 // pred_check_branch
    %14 = sbr.rel (0) target = $region13
  $region12: #{forward.13} parent=0 // pred_region
    _
  $region13: #{forward.13} parent=0 // pred_fallthru
    _
  // Predicated region
  $region14: #{forward.13} parent=0 // pred_check
    _
  $region15: #{forward.13} parent=0 // pred_check_branch
    %16 = sbr.rel (0) target = $region17
  $region16: #{forward.13} parent=0 // pred_region
    _
  $region17: #{forward.13} parent=0 // pred_fallthru
    _
  %p18 = scmp.eq.s32.totalorder 0, 0
  // Predicated region
  $region18: #{forward.13} parent=0 // pred_check
    %p19 = pneg %p18
  $region19: #{forward.13} parent=0 // pred_check_branch
    %21 = sbr.rel (%p19) target = $region21
  $region20: #{forward.13} parent=0 // pred_region
    %vm22 = vcmask 261120
    %23 = vst.msk [vmem:[#allocation2] sm:$0xff] %vm22, 0.0
    %24 = vst.msk [vmem:[#allocation2 + $0x8] sm:$0xff] %vm22, 0.0
  $region21: #{forward.13} parent=0 // pred_fallthru
    _
  %v25 = vld [vmem:[#allocation2] sm:$0xff]
  %v26 = vld [vmem:[#allocation2 + $0x8] sm:$0xff]
  %v27 = vld [vmem:[%s0] sm:$0xf]
  %v28 = vld [vmem:[%s0 + $0x4] sm:$0xf]
  %v29 = vld [vmem:[%s1] sm:$0xf]
  %v30 = vld [vmem:[%s1 + $0x4] sm:$0xf]
  %v31 = vld [vmem:[%s1 + $0x8] sm:$0xf]
  %v32 = vld [vmem:[%s1 + $0xc] sm:$0xf]
  %v35 = vunpack.c.l.b16 %v27
  %v36 = vunpack.c.l.b16 %v28
  %v37 = vpack.c.b16 %v36, %v35
  %v42 = vunpack.c.l.b16 %v29
  %v43 = vunpack.c.l.b16 %v30
  %v44 = vunpack.c.l.b16 %v31
  %v45 = vunpack.c.l.b16 %v32
  %v46 = vpack.c.b16 %v43, %v42
  %v47 = vpack.c.b16 %v45, %v44
  %vm50 = vcmask 261120
  %v52 = vsel %vm50, %v37, 0
  %54 = vmatpush.bf16.msra.mxu0 0
  %55 = vmatpush.bf16.msra.mxu0 0
  %56 = vmatpush.bf16.msra.mxu0 0
  %57 = vmatpush.bf16.msra.mxu0 0
  %58 = vmatpush.bf16.msra.mxu0 0
  %59 = vmatpush.bf16.msra.mxu0 0
  %60 = vmatpush.bf16.msra.mxu0 %v47
  %61 = vmatpush.bf16.msra.mxu0 %v46
  %62 = vmatmul.bf16.gmra.mxu0 %v52
  %v63 = vpop.f32.mrf.mxu0
  %v64 = vadd.f32 0.0, %v63
  %v65 = vpop.f32.mrf.mxu0
  %v66 = vadd.f32 0.0, %v65
  %67 = vdwg.mxu0
  %v68 = vadd.f32 %v25, %v64
  %v69 = vadd.f32 %v26, %v66
  %70 = vst.msk [vmem:[#allocation2] sm:$0xff] %vm50, %v68
  %71 = vst.msk [vmem:[#allocation2 + $0x8] sm:$0xff] %vm50, %v69
  // Predicated region
  $region22: #{forward.13} parent=0 // pred_check
    %p72 = pneg %p18
  $region23: #{forward.13} parent=0 // pred_check_branch
    %74 = sbr.rel (%p72) target = $region25
  $region24: #{forward.13} parent=0 // pred_region
    %v75 = vld [vmem:[#allocation2] sm:$0xff]
    %v76 = vld [vmem:[#allocation2 + $0x8] sm:$0xff]
    %v77 = vld [vmem:[%s2] sm:$0x1]
    %v79 = vperm.slane %v77, 0
    %v81 = vadd.f32 %v75, %v79
    %v82 = vadd.f32 %v76, %v79
    %v83 = vld [vmem:[%s3] sm:$0xff]
    %v84 = vld [vmem:[%s3 + $0x8] sm:$0xff]
    %v85 = vadd.f32 %v81, %v83
    %v86 = vadd.f32 %v82, %v84
    %87 = vst.msk [vmem:[%s4] sm:$0xff] %vm50, %v85
    %88 = vst.msk [vmem:[%s4 + $0x8] sm:$0xff] %vm50, %v86
  $region25: #{forward.13} parent=0 // pred_fallthru
    _
  // Predicated region
  $region26: #{forward.13} parent=0 // pred_check
    _
  $region27: #{forward.13} parent=0 // pred_check_branch
    %90 = sbr.rel (0) target = $region29
  $region28: #{forward.13} parent=0 // pred_region
    _
  $region29: #{forward.13} parent=0 // pred_fallthru
    _
  // Predicated region
  $region30: #{forward.13} parent=0 // pred_check
    _
  $region31: #{forward.13} parent=0 // pred_check_branch
    %92 = sbr.rel (0) target = $region33
  $region32: #{forward.13} parent=0 // pred_region
    _
  $region33: #{forward.13} parent=0 // pred_fallthru
    _

// kernel: forward.11
$region0: #{forward.11}
  #allocation0 [shape = 'u32[]', space=smem, size = 0x4, offset = 0x4, fixed_abs, tag = 'smem constant byte address 0x4 - core index']
  #allocation1 [shape = 'u32[72,128]{1,0:T(1,128)}', space=vmem, size = 0x9000, scoped, tag = 'internal scratch']
  #allocation2 [shape = 'bf16[16,32]{1,0:T(8,128)(2,1)}', space=vmem, size = 0x1000, scoped, tag = 'scratch operand']
  %s0 = inlined_call_operand.vmem [shape: f32[16,32], index: 0, kind: input, shape index: {}]
  %s1 = inlined_call_operand.vmem [shape: f32[1,32], index: 1, kind: input, shape index: {}]
  %s2 = inlined_call_operand.vmem [shape: f32[1,32], index: 2, kind: input, shape index: {}]
  %s3 = inlined_call_operand.vmem [shape: bf16[32,96], index: 3, kind: input, shape index: {}]
  %s4 = inlined_call_operand.vmem [shape: f32[1,96], index: 4, kind: input, shape index: {}]
  %s5 = inlined_call_operand.vmem [shape: bf16[16,96], index: 5, kind: output, shape index: {}]
  %s6 = sld [smem:[#allocation0]]
  $region34: #{forward.11} parent=0
    _
  %s8 = ssub.s32 1, %s6
  %s9 = scalar_select 0, %s8, %s6
  // Predicated region
  $region2: #{forward.11} parent=0 // pred_check
    _
  $region3: #{forward.11} parent=0 // pred_check_branch
    %11 = sbr.rel (0) target = $region5
  $region4: #{forward.11} parent=0 // pred_region
    _
  $region5: #{forward.11} parent=0 // pred_fallthru
    _
  // Predicated region
  $region6: #{forward.11} parent=0 // pred_check
    _
  $region7: #{forward.11} parent=0 // pred_check_branch
    %13 = sbr.rel (0) target = $region9
  $region8: #{forward.11} parent=0 // pred_region
    _
  $region9: #{forward.11} parent=0 // pred_fallthru
    _
  // Predicated region
  $region10: #{forward.11} parent=0 // pred_check
    _
  $region11: #{forward.11} parent=0 // pred_check_branch
    %15 = sbr.rel (0) target = $region13
  $region12: #{forward.11} parent=0 // pred_region
    _
  $region13: #{forward.11} parent=0 // pred_fallthru
    _
  // Predicated region
  $region14: #{forward.11} parent=0 // pred_check
    _
  $region15: #{forward.11} parent=0 // pred_check_branch
    %17 = sbr.rel (0) target = $region17
  $region16: #{forward.11} parent=0 // pred_region
    _
  $region17: #{forward.11} parent=0 // pred_fallthru
    _
  // Predicated region
  $region18: #{forward.11} parent=0 // pred_check
    _
  $region19: #{forward.11} parent=0 // pred_check_branch
    %19 = sbr.rel (0) target = $region21
  $region20: #{forward.11} parent=0 // pred_region
    _
  $region21: #{forward.11} parent=0 // pred_fallthru
    _
  %p21 = scmp.eq.s32.totalorder 0, 0
  // Predicated region
  $region22: #{forward.11} parent=0 // pred_check
    %p22 = pneg %p21
  $region23: #{forward.11} parent=0 // pred_check_branch
    %24 = sbr.rel (%p22) target = $region25
  $region24: #{forward.11} parent=0 // pred_region
    %v25 = vld [vmem:[%s0] sm:$0xff]
    %v26 = vld [vmem:[%s0 + $0x8] sm:$0xff]
    %vm27 = vcmask 261120
    %v28 = vsel %vm27, %v25, 0.0
    %29 = vadd.xlane.f32.xlu0 %v28
    %v30 = vpop.xlane.xlu0 %29
    %v31 = vsel %vm27, %v26, 0.0
    %32 = vadd.xlane.f32.xlu0 %v31
    %v33 = vpop.xlane.xlu0 %32
    %v34 = vrcp.pop 32.0
    %v35 = vmul.f32 32.0, %v34
    %v36 = vsub.f32 1.0, %v35
    %v37 = vmul.f32 %v34, %v36
    %v38 = vadd.f32 %v34, %v37
    %vm39 = vweird.f32 %v34
    %v40 = vsel %vm39, %v34, %v38
    %v41 = vmul.f32 %v30, %v40
    %v42 = vmul.f32 %v33, %v40
    %v43 = vsub.f32 %v25, %v41
    %v44 = vsub.f32 %v26, %v42
    %v45 = vmul.f32 %v43, %v43
    %v46 = vmul.f32 %v44, %v44
    %v47 = vsel %vm27, %v45, 0.0
    %48 = vadd.xlane.f32.xlu0 %v47
    %v49 = vpop.xlane.xlu0 %48
    %v50 = vsel %vm27, %v46, 0.0
    %51 = vadd.xlane.f32.xlu0 %v50
    %v52 = vpop.xlane.xlu0 %51
    %v53 = vmul.f32 %v49, %v40
    %v54 = vmul.f32 %v52, %v40
    %v55 = vadd.f32 %v53, 1e-05
    %v56 = vadd.f32 %v54, 1e-05
    %v57 = vrsqrt.pop %v55
    %v58 = vmul.f32 %v57, %v55
    %v59 = vmul.f32 %v58, %v57
    %v60 = vmul.f32 0.5, %v59
    %v61 = vsub.f32 1.5, %v60
    %v62 = vmul.f32 %v57, %v61
    %vm63 = vweird.f32 %v55
    %vm64 = vweird.f32 %v57
    %vm65 = vmor %vm63, %vm64
    %v66 = vsel %vm65, %v57, %v62
    %v67 = vrsqrt.pop %v56
    %v68 = vmul.f32 %v67, %v56
    %v69 = vmul.f32 %v68, %v67
    %v70 = vmul.f32 0.5, %v69
    %v71 = vsub.f32 1.5, %v70
    %v72 = vmul.f32 %v67, %v71
    %vm73 = vweird.f32 %v56
    %vm74 = vweird.f32 %v67
    %vm75 = vmor %vm73, %vm74
    %v76 = vsel %vm75, %v67, %v72
    %v77 = vmul.f32 %v43, %v66
    %v78 = vmul.f32 %v44, %v76
    %v79 = vld [vmem:[%s1] sm:$0x1]
    %v81 = vperm.slane %v79, 0
    %v83 = vmul.f32 %v77, %v81
    %v84 = vmul.f32 %v78, %v81
    %v85 = vld [vmem:[%s2] sm:$0x1]
    %v87 = vperm.slane %v85, 0
    %v89 = vadd.f32 %v83, %v87
    %v90 = vadd.f32 %v84, %v87
    %v91 = vpack.c.bf16 %v89, %v89
    %v92 = vpack.c.bf16 %v90, %v90
    %vm93 = vcmask 257024
    %94 = vst.msk [vmem:[#allocation2] sm:$0xf] %vm93, %v91
    %95 = vst.msk [vmem:[#allocation2 + $0x4] sm:$0xf] %vm93, %v92
  $region25: #{forward.11} parent=0 // pred_fallthru
    _
  %v96 = vld [vmem:[#allocation2] sm:$0xf]
  %v97 = vld [vmem:[#allocation2 + $0x4] sm:$0xf]
  %v98 = vld [vmem:[%s3] sm:$0xf]
  %v99 = vld [vmem:[%s3 + $0x4] sm:$0xf]
  %v100 = vld [vmem:[%s3 + $0x8] sm:$0xf]
  %v101 = vld [vmem:[%s3 + $0xc] sm:$0xf]
  %v102 = vld [vmem:[%s4] sm:$0x1]
  %v104 = vperm.slane %v102, 0
  %v108 = vunpack.c.l.b16 %v96
  %v109 = vunpack.c.l.b16 %v97
  %v110 = vpack.c.b16 %v109, %v108
  %v115 = vunpack.c.l.b16 %v98
  %v116 = vunpack.c.l.b16 %v99
  %v117 = vunpack.c.l.b16 %v100
  %v118 = vunpack.c.l.b16 %v101
  %v119 = vpack.c.b16 %v116, %v115
  %v120 = vpack.c.b16 %v118, %v117
  %vm123 = vcmask 261120
  %v125 = vsel %vm123, %v110, 0
  %127 = vmatpush.bf16.msra.mxu0 0
  %128 = vmatpush.bf16.msra.mxu0 0
  %129 = vmatpush.bf16.msra.mxu0 0
  %130 = vmatpush.bf16.msra.mxu0 0
  %131 = vmatpush.bf16.msra.mxu0 0
  %132 = vmatpush.bf16.msra.mxu0 0
  %133 = vmatpush.bf16.msra.mxu0 %v120
  %134 = vmatpush.bf16.msra.mxu0 %v119
  %135 = vmatmul.bf16.gmra.mxu0 %v125
  %v136 = vpop.f32.mrf.mxu0
  %v137 = vadd.f32 %v104, %v136
  %v138 = vpop.f32.mrf.mxu0
  %v139 = vadd.f32 %v104, %v138
  %140 = vdwg.mxu0
  %v141 = vpack.c.bf16 %v137, %v137
  %v142 = vpack.c.bf16 %v139, %v139
  %vm143 = vcmask 781312
  %144 = vst.msk [vmem:[%s5] sm:$0xf] %vm143, %v141
  %145 = vst.msk [vmem:[%s5 + $0x4] sm:$0xf] %vm143, %v142
  // Predicated region
  $region26: #{forward.11} parent=0 // pred_check
    _
  $region27: #{forward.11} parent=0 // pred_check_branch
    %147 = sbr.rel (0) target = $region29
  $region28: #{forward.11} parent=0 // pred_region
    _
  $region29: #{forward.11} parent=0 // pred_fallthru
    _
  // Predicated region
  $region30: #{forward.11} parent=0 // pred_check
    _
  $region31: #{forward.11} parent=0 // pred_check_branch
    %149 = sbr.rel (0) target = $region33
  $region32: #{forward.11} parent=0 // pred_region
    _
  $region33: #{forward.11} parent=0 // pred_fallthru
    _

// kernel: forward.14
$region0: #{forward.14}
  #allocation0 [shape = 'u32[]', space=smem, size = 0x4, offset = 0x4, fixed_abs, tag = 'smem constant byte address 0x4 - core index']
  #allocation1 [shape = 'u32[72,128]{1,0:T(1,128)}', space=vmem, size = 0x9000, scoped, tag = 'internal scratch']
  #allocation2 [shape = 'bf16[16,32]{1,0:T(8,128)(2,1)}', space=vmem, size = 0x1000, scoped, tag = 'scratch operand']
  %s0 = inlined_call_operand.vmem [shape: f32[16,32], index: 0, kind: input, shape index: {}]
  %s1 = inlined_call_operand.vmem [shape: f32[1,32], index: 1, kind: input, shape index: {}]
  %s2 = inlined_call_operand.vmem [shape: f32[1,32], index: 2, kind: input, shape index: {}]
  %s3 = inlined_call_operand.vmem [shape: bf16[32,128], index: 3, kind: input, shape index: {}]
  %s4 = inlined_call_operand.vmem [shape: f32[1,128], index: 4, kind: input, shape index: {}]
  %s5 = inlined_call_operand.vmem [shape: bf16[16,128], index: 5, kind: output, shape index: {}]
  %s6 = sld [smem:[#allocation0]]
  $region34: #{forward.14} parent=0
    _
  %s8 = ssub.s32 1, %s6
  %s9 = scalar_select 0, %s8, %s6
  // Predicated region
  $region2: #{forward.14} parent=0 // pred_check
    _
  $region3: #{forward.14} parent=0 // pred_check_branch
    %11 = sbr.rel (0) target = $region5
  $region4: #{forward.14} parent=0 // pred_region
    _
  $region5: #{forward.14} parent=0 // pred_fallthru
    _
  // Predicated region
  $region6: #{forward.14} parent=0 // pred_check
    _
  $region7: #{forward.14} parent=0 // pred_check_branch
    %13 = sbr.rel (0) target = $region9
  $region8: #{forward.14} parent=0 // pred_region
    _
  $region9: #{forward.14} parent=0 // pred_fallthru
    _
  // Predicated region
  $region10: #{forward.14} parent=0 // pred_check
    _
  $region11: #{forward.14} parent=0 // pred_check_branch
    %15 = sbr.rel (0) target = $region13
  $region12: #{forward.14} parent=0 // pred_region
    _
  $region13: #{forward.14} parent=0 // pred_fallthru
    _
  // Predicated region
  $region14: #{forward.14} parent=0 // pred_check
    _
  $region15: #{forward.14} parent=0 // pred_check_branch
    %17 = sbr.rel (0) target = $region17
  $region16: #{forward.14} parent=0 // pred_region
    _
  $region17: #{forward.14} parent=0 // pred_fallthru
    _
  // Predicated region
  $region18: #{forward.14} parent=0 // pred_check
    _
  $region19: #{forward.14} parent=0 // pred_check_branch
    %19 = sbr.rel (0) target = $region21
  $region20: #{forward.14} parent=0 // pred_region
    _
  $region21: #{forward.14} parent=0 // pred_fallthru
    _
  %p21 = scmp.eq.s32.totalorder 0, 0
  // Predicated region
  $region22: #{forward.14} parent=0 // pred_check
    %p22 = pneg %p21
  $region23: #{forward.14} parent=0 // pred_check_branch
    %24 = sbr.rel (%p22) target = $region25
  $region24: #{forward.14} parent=0 // pred_region
    %v25 = vld [vmem:[%s0] sm:$0xff]
    %v26 = vld [vmem:[%s0 + $0x8] sm:$0xff]
    %vm27 = vcmask 261120
    %v28 = vsel %vm27, %v25, 0.0
    %29 = vadd.xlane.f32.xlu0 %v28
    %v30 = vpop.xlane.xlu0 %29
    %v31 = vsel %vm27, %v26, 0.0
    %32 = vadd.xlane.f32.xlu0 %v31
    %v33 = vpop.xlane.xlu0 %32
    %v34 = vrcp.pop 32.0
    %v35 = vmul.f32 32.0, %v34
    %v36 = vsub.f32 1.0, %v35
    %v37 = vmul.f32 %v34, %v36
    %v38 = vadd.f32 %v34, %v37
    %vm39 = vweird.f32 %v34
    %v40 = vsel %vm39, %v34, %v38
    %v41 = vmul.f32 %v30, %v40
    %v42 = vmul.f32 %v33, %v40
    %v43 = vsub.f32 %v25, %v41
    %v44 = vsub.f32 %v26, %v42
    %v45 = vmul.f32 %v43, %v43
    %v46 = vmul.f32 %v44, %v44
    %v47 = vsel %vm27, %v45, 0.0
    %48 = vadd.xlane.f32.xlu0 %v47
    %v49 = vpop.xlane.xlu0 %48
    %v50 = vsel %vm27, %v46, 0.0
    %51 = vadd.xlane.f32.xlu0 %v50
    %v52 = vpop.xlane.xlu0 %51
    %v53 = vmul.f32 %v49, %v40
    %v54 = vmul.f32 %v52, %v40
    %v55 = vadd.f32 %v53, 1e-05
    %v56 = vadd.f32 %v54, 1e-05
    %v57 = vrsqrt.pop %v55
    %v58 = vmul.f32 %v57, %v55
    %v59 = vmul.f32 %v58, %v57
    %v60 = vmul.f32 0.5, %v59
    %v61 = vsub.f32 1.5, %v60
    %v62 = vmul.f32 %v57, %v61
    %vm63 = vweird.f32 %v55
    %vm64 = vweird.f32 %v57
    %vm65 = vmor %vm63, %vm64
    %v66 = vsel %vm65, %v57, %v62
    %v67 = vrsqrt.pop %v56
    %v68 = vmul.f32 %v67, %v56
    %v69 = vmul.f32 %v68, %v67
    %v70 = vmul.f32 0.5, %v69
    %v71 = vsub.f32 1.5, %v70
    %v72 = vmul.f32 %v67, %v71
    %vm73 = vweird.f32 %v56
    %vm74 = vweird.f32 %v67
    %vm75 = vmor %vm73, %vm74
    %v76 = vsel %vm75, %v67, %v72
    %v77 = vmul.f32 %v43, %v66
    %v78 = vmul.f32 %v44, %v76
    %v79 = vld [vmem:[%s1] sm:$0x1]
    %v81 = vperm.slane %v79, 0
    %v83 = vmul.f32 %v77, %v81
    %v84 = vmul.f32 %v78, %v81
    %v85 = vld [vmem:[%s2] sm:$0x1]
    %v87 = vperm.slane %v85, 0
    %v89 = vadd.f32 %v83, %v87
    %v90 = vadd.f32 %v84, %v87
    %v91 = vpack.c.bf16 %v89, %v89
    %v92 = vpack.c.bf16 %v90, %v90
    %vm93 = vcmask 257024
    %94 = vst.msk [vmem:[#allocation2] sm:$0xf] %vm93, %v91
    %95 = vst.msk [vmem:[#allocation2 + $0x4] sm:$0xf] %vm93, %v92
  $region25: #{forward.14} parent=0 // pred_fallthru
    _
  %v96 = vld [vmem:[#allocation2] sm:$0xf]
  %v97 = vld [vmem:[#allocation2 + $0x4] sm:$0xf]
  %v98 = vld [vmem:[%s3] sm:$0xf]
  %v99 = vld [vmem:[%s3 + $0x4] sm:$0xf]
  %v100 = vld [vmem:[%s3 + $0x8] sm:$0xf]
  %v101 = vld [vmem:[%s3 + $0xc] sm:$0xf]
  %v102 = vld [vmem:[%s4] sm:$0x1]
  %v104 = vperm.slane %v102, 0
  %v108 = vunpack.c.l.b16 %v96
  %v109 = vunpack.c.l.b16 %v97
  %v110 = vpack.c.b16 %v109, %v108
  %v115 = vunpack.c.l.b16 %v98
  %v116 = vunpack.c.l.b16 %v99
  %v117 = vunpack.c.l.b16 %v100
  %v118 = vunpack.c.l.b16 %v101
  %v119 = vpack.c.b16 %v116, %v115
  %v120 = vpack.c.b16 %v118, %v117
  %vm123 = vcmask 261120
  %v125 = vsel %vm123, %v110, 0
  %127 = vmatpush.bf16.msra.mxu0 0
  %128 = vmatpush.bf16.msra.mxu0 0
  %129 = vmatpush.bf16.msra.mxu0 0
  %130 = vmatpush.bf16.msra.mxu0 0
  %131 = vmatpush.bf16.msra.mxu0 0
  %132 = vmatpush.bf16.msra.mxu0 0
  %133 = vmatpush.bf16.msra.mxu0 %v120
  %134 = vmatpush.bf16.msra.mxu0 %v119
  %135 = vmatmul.bf16.gmra.mxu0 %v125
  %v136 = vpop.f32.mrf.mxu0
  %v137 = vadd.f32 %v104, %v136
  %v138 = vpop.f32.mrf.mxu0
  %v139 = vadd.f32 %v104, %v138
  %140 = vdwg.mxu0
  %v141 = vmul.f32 %v137, 0.70710677
  %v142 = vmul.f32 %v139, 0.70710677
  %vm143 = vcmp.lt.f32.partialorder %v141, 0.0
  %vm144 = vcmp.lt.f32.partialorder %v142, 0.0
  %v145 = vsel %vm143, -1.0, 1.0
  %v146 = vsel %vm144, -1.0, 1.0
  %v147 = vand.u32 2147483647, %v141
  %v148 = vand.u32 2147483647, %v142
  %v149 = vmul.f32 %v147, 0.3275911
  %v150 = vmul.f32 %v148, 0.3275911
  %v151 = vadd.f32 %v149, 1.0
  %v152 = vadd.f32 %v150, 1.0
  %v153 = vrcp.pop %v151
  %v154 = vrcp.pop %v152
  %v155 = vmul.f32 %v153, 1.0614054
  %v156 = vmul.f32 %v154, 1.0614054
  %v157 = vadd.f32 %v155, -1.4531521
  %v158 = vadd.f32 %v156, -1.4531521
  %v159 = vmul.f32 %v157, %v153
  %v160 = vmul.f32 %v158, %v154
  %v161 = vadd.f32 %v159, 1.4214138
  %v162 = vadd.f32 %v160, 1.4214138
  %v163 = vmul.f32 %v161, %v153
  %v164 = vmul.f32 %v162, %v154
  %v165 = vadd.f32 %v163, -0.28449672
  %v166 = vadd.f32 %v164, -0.28449672
  %v167 = vmul.f32 %v165, %v153
  %v168 = vmul.f32 %v166, %v154
  %v169 = vadd.f32 %v167, 0.2548296
  %v170 = vadd.f32 %v168, 0.2548296
  %v171 = vmul.f32 %v169, %v153
  %v172 = vmul.f32 %v170, %v154
  %v173 = vsub.f32 0.0, %v147
  %v174 = vsub.f32 0.0, %v148
  %v175 = vmul.f32 %v173, %v147
  %v176 = vmul.f32 %v174, %v148
  %v177 = vmul.f32 %v175, 1.442695
  %v178 = vpow.pop %v177
  %v179 = vmul.f32 %v176, 1.442695
  %v180 = vpow.pop %v179
  %v181 = vmul.f32 %v171, %v178
  %v182 = vmul.f32 %v172, %v180
  %v183 = vsub.f32 1.0, %v181
  %v184 = vsub.f32 1.0, %v182
  %v185 = vmul.f32 %v145, %v183
  %v186 = vmul.f32 %v146, %v184
  %v187 = vmul.f32 %v137, 0.5
  %v188 = vmul.f32 %v139, 0.5
  %v189 = vadd.f32 %v185, 1.0
  %v190 = vadd.f32 %v186, 1.0
  %v191 = vmul.f32 %v187, %v189
  %v192 = vmul.f32 %v188, %v190
  %v193 = vpack.c.bf16 %v191, %v191
  %v194 = vpack.c.bf16 %v192, %v192
  %195 = vst [vmem:[%s5] sm:$0xf] %v193
  %196 = vst [vmem:[%s5 + $0x4] sm:$0xf] %v194
  // Predicated region
  $region26: #{forward.14} parent=0 // pred_check
    _
  $region27: #{forward.14} parent=0 // pred_check_branch
    %198 = sbr.rel (0) target = $region29
  $region28: #{forward.14} parent=0 // pred_region
    _
  $region29: #{forward.14} parent=0 // pred_fallthru
    _
  // Predicated region
  $region30: #{forward.14} parent=0 // pred_check
    _
  $region31: #{forward.14} parent=0 // pred_check_branch
    %200 = sbr.rel (0) target = $region33
  $region32: #{forward.14} parent=0 // pred_region
    _
  $region33: #{forward.14} parent=0 // pred_fallthru
    _

// kernel: forward.21
$region0: #{forward.21}
  #allocation0 [shape = 'u32[]', space=smem, size = 0x4, offset = 0x4, fixed_abs, tag = 'smem constant byte address 0x4 - core index']
  #allocation1 [shape = 'u32[72,128]{1,0:T(1,128)}', space=vmem, size = 0x9000, scoped, tag = 'internal scratch']
  #allocation2 [shape = 'bf16[16,32]{1,0:T(8,128)(2,1)}', space=vmem, size = 0x1000, scoped, tag = 'scratch operand']
  %s0 = inlined_call_operand.vmem [shape: f32[16,32], index: 0, kind: input, shape index: {}]
  %s1 = inlined_call_operand.vmem [shape: f32[1,32], index: 1, kind: input, shape index: {}]
  %s2 = inlined_call_operand.vmem [shape: f32[1,32], index: 2, kind: input, shape index: {}]
  %s3 = inlined_call_operand.vmem [shape: bf16[32,64], index: 3, kind: input, shape index: {}]
  %s4 = inlined_call_operand.vmem [shape: f32[1,64], index: 4, kind: input, shape index: {}]
  %s5 = inlined_call_operand.hbm [shape: f32[16,64], index: 5, kind: output, shape index: {}]
  %s6 = sld [smem:[#allocation0]]
  $region34: #{forward.21} parent=0
    _
  %s8 = ssub.s32 1, %s6
  %s9 = scalar_select 0, %s8, %s6
  $region1: #{forward.21} parent=0
    #allocation3 [shape = 'u8[8192]{0}', space=vmem, size = 0x2000, scoped, tag = 'output window, operand 0, single buffered']
    #allocation4 [shape = 's32[1]{0}', space=sflag, size = 0x4, scoped, tag = 'scoped memory for forward.21']
    %10 = vsyncpa [#allocation4], 0
    // Predicated region
    $region2: #{forward.21} parent=1 // pred_check
      _
    $region3: #{forward.21} parent=1 // pred_check_branch
      %12 = sbr.rel (0) target = $region5
    $region4: #{forward.21} parent=1 // pred_region
      _
    $region5: #{forward.21} parent=1 // pred_fallthru
      _
    // Predicated region
    $region6: #{forward.21} parent=1 // pred_check
      _
    $region7: #{forward.21} parent=1 // pred_check_branch
      %14 = sbr.rel (0) target = $region9
    $region8: #{forward.21} parent=1 // pred_region
      _
    $region9: #{forward.21} parent=1 // pred_fallthru
      _
    // Predicated region
    $region10: #{forward.21} parent=1 // pred_check
      _
    $region11: #{forward.21} parent=1 // pred_check_branch
      %16 = sbr.rel (0) target = $region13
    $region12: #{forward.21} parent=1 // pred_region
      _
    $region13: #{forward.21} parent=1 // pred_fallthru
      _
    // Predicated region
    $region14: #{forward.21} parent=1 // pred_check
      _
    $region15: #{forward.21} parent=1 // pred_check_branch
      %18 = sbr.rel (0) target = $region17
    $region16: #{forward.21} parent=1 // pred_region
      _
    $region17: #{forward.21} parent=1 // pred_fallthru
      _
    // Predicated region
    $region18: #{forward.21} parent=1 // pred_check
      _
    $region19: #{forward.21} parent=1 // pred_check_branch
      %20 = sbr.rel (0) target = $region21
    $region20: #{forward.21} parent=1 // pred_region
      _
    $region21: #{forward.21} parent=1 // pred_fallthru
      _
    %p22 = scmp.eq.s32.totalorder 0, 0
    // Predicated region
    $region22: #{forward.21} parent=1 // pred_check
      %p23 = pneg %p22
    $region23: #{forward.21} parent=1 // pred_check_branch
      %25 = sbr.rel (%p23) target = $region25
    $region24: #{forward.21} parent=1 // pred_region
      %v26 = vld [vmem:[%s0] sm:$0xff]
      %v27 = vld [vmem:[%s0 + $0x8] sm:$0xff]
      %vm28 = vcmask 261120
      %v29 = vsel %vm28, %v26, 0.0
      %30 = vadd.xlane.f32.xlu0 %v29
      %v31 = vpop.xlane.xlu0 %30
      %v32 = vsel %vm28, %v27, 0.0
      %33 = vadd.xlane.f32.xlu0 %v32
      %v34 = vpop.xlane.xlu0 %33
      %v35 = vrcp.pop 32.0
      %v36 = vmul.f32 32.0, %v35
      %v37 = vsub.f32 1.0, %v36
      %v38 = vmul.f32 %v35, %v37
      %v39 = vadd.f32 %v35, %v38
      %vm40 = vweird.f32 %v35
      %v41 = vsel %vm40, %v35, %v39
      %v42 = vmul.f32 %v31, %v41
      %v43 = vmul.f32 %v34, %v41
      %v44 = vsub.f32 %v26, %v42
      %v45 = vsub.f32 %v27, %v43
      %v46 = vmul.f32 %v44, %v44
      %v47 = vmul.f32 %v45, %v45
      %v48 = vsel %vm28, %v46, 0.0
      %49 = vadd.xlane.f32.xlu0 %v48
      %v50 = vpop.xlane.xlu0 %49
      %v51 = vsel %vm28, %v47, 0.0
      %52 = vadd.xlane.f32.xlu0 %v51
      %v53 = vpop.xlane.xlu0 %52
      %v54 = vmul.f32 %v50, %v41
      %v55 = vmul.f32 %v53, %v41
      %v56 = vadd.f32 %v54, 1e-05
      %v57 = vadd.f32 %v55, 1e-05
      %v58 = vrsqrt.pop %v56
      %v59 = vmul.f32 %v58, %v56
      %v60 = vmul.f32 %v59, %v58
      %v61 = vmul.f32 0.5, %v60
      %v62 = vsub.f32 1.5, %v61
      %v63 = vmul.f32 %v58, %v62
      %vm64 = vweird.f32 %v56
      %vm65 = vweird.f32 %v58
      %vm66 = vmor %vm64, %vm65
      %v67 = vsel %vm66, %v58, %v63
      %v68 = vrsqrt.pop %v57
      %v69 = vmul.f32 %v68, %v57
      %v70 = vmul.f32 %v69, %v68
      %v71 = vmul.f32 0.5, %v70
      %v72 = vsub.f32 1.5, %v71
      %v73 = vmul.f32 %v68, %v72
      %vm74 = vweird.f32 %v57
      %vm75 = vweird.f32 %v68
      %vm76 = vmor %vm74, %vm75
      %v77 = vsel %vm76, %v68, %v73
      %v78 = vmul.f32 %v44, %v67
      %v79 = vmul.f32 %v45, %v77
      %v80 = vld [vmem:[%s1] sm:$0x1]
      %v82 = vperm.slane %v80, 0
      %v84 = vmul.f32 %v78, %v82
      %v85 = vmul.f32 %v79, %v82
      %v86 = vld [vmem:[%s2] sm:$0x1]
      %v88 = vperm.slane %v86, 0
      %v90 = vadd.f32 %v84, %v88
      %v91 = vadd.f32 %v85, %v88
      %v92 = vpack.c.bf16 %v90, %v90
      %v93 = vpack.c.bf16 %v91, %v91
      %vm94 = vcmask 257024
      %95 = vst.msk [vmem:[#allocation2] sm:$0xf] %vm94, %v92
      %96 = vst.msk [vmem:[#allocation2 + $0x4] sm:$0xf] %vm94, %v93
    $region25: #{forward.21} parent=1 // pred_fallthru
      _
    %v97 = vld [vmem:[#allocation2] sm:$0xf]
    %v98 = vld [vmem:[#allocation2 + $0x4] sm:$0xf]
    %v99 = vld [vmem:[%s3] sm:$0xf]
    %v100 = vld [vmem:[%s3 + $0x4] sm:$0xf]
    %v101 = vld [vmem:[%s3 + $0x8] sm:$0xf]
    %v102 = vld [vmem:[%s3 + $0xc] sm:$0xf]
    %v103 = vld [vmem:[%s4] sm:$0x1]
    %v105 = vperm.slane %v103, 0
    %v109 = vunpack.c.l.b16 %v97
    %v110 = vunpack.c.l.b16 %v98
    %v111 = vpack.c.b16 %v110, %v109
    %v116 = vunpack.c.l.b16 %v99
    %v117 = vunpack.c.l.b16 %v100
    %v118 = vunpack.c.l.b16 %v101
    %v119 = vunpack.c.l.b16 %v102
    %v120 = vpack.c.b16 %v117, %v116
    %v121 = vpack.c.b16 %v119, %v118
    %vm124 = vcmask 261120
    %v126 = vsel %vm124, %v111, 0
    %128 = vmatpush.bf16.msra.mxu0 0
    %129 = vmatpush.bf16.msra.mxu0 0
    %130 = vmatpush.bf16.msra.mxu0 0
    %131 = vmatpush.bf16.msra.mxu0 0
    %132 = vmatpush.bf16.msra.mxu0 0
    %133 = vmatpush.bf16.msra.mxu0 0
    %134 = vmatpush.bf16.msra.mxu0 %v121
    %135 = vmatpush.bf16.msra.mxu0 %v120
    %136 = vmatmul.bf16.gmra.mxu0 %v126
    %v137 = vpop.f32.mrf.mxu0
    %v138 = vadd.f32 %v105, %v137
    %v139 = vpop.f32.mrf.mxu0
    %v140 = vadd.f32 %v105, %v139
    %141 = vdwg.mxu0
    %vm142 = vcmask 523264
    %143 = vst.msk [vmem:[#allocation3] sm:$0xff] %vm142, %v138
    %144 = vst.msk [vmem:[#allocation3 + $0x8] sm:$0xff] %vm142, %v140
    // Predicated region
    $region26: #{forward.21} parent=1 // pred_check
      _
    $region27: #{forward.21} parent=1 // pred_check_branch
      %146 = sbr.rel (0) target = $region29
    $region28: #{forward.21} parent=1 // pred_region
      %148 = vsyncadd [#allocation4], 0
      %s149 = sshll.u32 [#allocation3], 4
      %s150 = int_to_ptr.vmem [resolvable:$true] %s149
      %s151 = sshll.u32 %s5, 4
      %s152 = int_to_ptr.hbm [resolvable:$true] %s151
      %157 = dma.vmem_to_hbm [thread:$0]  %s150, 256, %s152, [#allocation4], 128, 128, 8
    $region29: #{forward.21} parent=1 // pred_fallthru
      _
    // Predicated region
    $region30: #{forward.21} parent=1 // pred_check
      _
    $region31: #{forward.21} parent=1 // pred_check_branch
      %159 = sbr.rel (0) target = $region33
    $region32: #{forward.21} parent=1 // pred_region
      %161 = dma.done [#allocation4], 256
    $region33: #{forward.21} parent=1 // pred_fallthru
      _
    %162 = vsyncpa [#allocation4], 1

// kernel: forward.15
$region0: #{forward.15}
  #allocation0 [shape = 'u32[]', space=smem, size = 0x4, offset = 0x4, fixed_abs, tag = 'smem constant byte address 0x4 - core index']
  #allocation1 [shape = 'u32[72,128]{1,0:T(1,128)}', space=vmem, size = 0x9000, scoped, tag = 'internal scratch']
  #allocation2 [shape = 'f32[16,32]{1,0:T(8,128)}', space=vmem, size = 0x2000, scoped, tag = 'scratch operand']
  %s0 = inlined_call_operand.vmem [shape: bf16[16,128], index: 0, kind: input, shape index: {}]
  %s1 = inlined_call_operand.vmem [shape: bf16[128,32], index: 1, kind: input, shape index: {}]
  %s2 = inlined_call_operand.vmem [shape: f32[1,32], index: 2, kind: input, shape index: {}]
  %s3 = inlined_call_operand.vmem [shape: f32[16,32], index: 3, kind: input, shape index: {}]
  %s4 = inlined_call_operand.vmem [shape: f32[16,32], index: 4, kind: output, shape index: {}]
  %s5 = sld [smem:[#allocation0]]
  $region34: #{forward.15} parent=0
    _
  %s7 = ssub.s32 1, %s5
  %s8 = scalar_select 0, %s7, %s5
  // Predicated region
  $region2: #{forward.15} parent=0 // pred_check
    _
  $region3: #{forward.15} parent=0 // pred_check_branch
    %10 = sbr.rel (0) target = $region5
  $region4: #{forward.15} parent=0 // pred_region
    _
  $region5: #{forward.15} parent=0 // pred_fallthru
    _
  // Predicated region
  $region6: #{forward.15} parent=0 // pred_check
    _
  $region7: #{forward.15} parent=0 // pred_check_branch
    %12 = sbr.rel (0) target = $region9
  $region8: #{forward.15} parent=0 // pred_region
    _
  $region9: #{forward.15} parent=0 // pred_fallthru
    _
  // Predicated region
  $region10: #{forward.15} parent=0 // pred_check
    _
  $region11: #{forward.15} parent=0 // pred_check_branch
    %14 = sbr.rel (0) target = $region13
  $region12: #{forward.15} parent=0 // pred_region
    _
  $region13: #{forward.15} parent=0 // pred_fallthru
    _
  // Predicated region
  $region14: #{forward.15} parent=0 // pred_check
    _
  $region15: #{forward.15} parent=0 // pred_check_branch
    %16 = sbr.rel (0) target = $region17
  $region16: #{forward.15} parent=0 // pred_region
    _
  $region17: #{forward.15} parent=0 // pred_fallthru
    _
  %p17 = scmp.eq.s32.totalorder 0, 0
  // Predicated region
  $region18: #{forward.15} parent=0 // pred_check
    %p18 = pneg %p17
  $region19: #{forward.15} parent=0 // pred_check_branch
    %20 = sbr.rel (%p18) target = $region21
  $region20: #{forward.15} parent=0 // pred_region
    %vm21 = vcmask 261120
    %22 = vst.msk [vmem:[#allocation2] sm:$0xff] %vm21, 0.0
    %23 = vst.msk [vmem:[#allocation2 + $0x8] sm:$0xff] %vm21, 0.0
  $region21: #{forward.15} parent=0 // pred_fallthru
    _
  %v24 = vld [vmem:[#allocation2] sm:$0xff]
  %v25 = vld [vmem:[#allocation2 + $0x8] sm:$0xff]
  %v26 = vld [vmem:[%s0] sm:$0xf]
  %v27 = vld [vmem:[%s0 + $0x4] sm:$0xf]
  %v28 = vld [vmem:[%s1] sm:$0xf]
  %v29 = vld [vmem:[%s1 + $0x4] sm:$0xf]
  %v30 = vld [vmem:[%s1 + $0x8] sm:$0xf]
  %v31 = vld [vmem:[%s1 + $0xc] sm:$0xf]
  %v32 = vld [vmem:[%s1 + $0x10] sm:$0xf]
  %v33 = vld [vmem:[%s1 + $0x14] sm:$0xf]
  %v34 = vld [vmem:[%s1 + $0x18] sm:$0xf]
  %v35 = vld [vmem:[%s1 + $0x1c] sm:$0xf]
  %v36 = vld [vmem:[%s1 + $0x20] sm:$0xf]
  %v37 = vld [vmem:[%s1 + $0x24] sm:$0xf]
  %v38 = vld [vmem:[%s1 + $0x28] sm:$0xf]
  %v39 = vld [vmem:[%s1 + $0x2c] sm:$0xf]
  %v40 = vld [vmem:[%s1 + $0x30] sm:$0xf]
  %v41 = vld [vmem:[%s1 + $0x34] sm:$0xf]
  %v42 = vld [vmem:[%s1 + $0x38] sm:$0xf]
  %v43 = vld [vmem:[%s1 + $0x3c] sm:$0xf]
  %v46 = vunpack.c.l.b16 %v26
  %v47 = vunpack.c.l.b16 %v27
  %v48 = vpack.c.b16 %v47, %v46
  %v66 = vunpack.c.l.b16 %v28
  %v67 = vunpack.c.l.b16 %v29
  %v68 = vunpack.c.l.b16 %v30
  %v69 = vunpack.c.l.b16 %v31
  %v70 = vunpack.c.l.b16 %v32
  %v71 = vunpack.c.l.b16 %v33
  %v72 = vunpack.c.l.b16 %v34
  %v73 = vunpack.c.l.b16 %v35
  %v74 = vunpack.c.l.b16 %v36
  %v75 = vunpack.c.l.b16 %v37
  %v76 = vunpack.c.l.b16 %v38
  %v77 = vunpack.c.l.b16 %v39
  %v78 = vunpack.c.l.b16 %v40
  %v79 = vunpack.c.l.b16 %v41
  %v80 = vunpack.c.l.b16 %v42
  %v81 = vunpack.c.l.b16 %v43
  %v82 = vpack.c.b16 %v67, %v66
  %v83 = vpack.c.b16 %v69, %v68
  %v84 = vpack.c.b16 %v71, %v70
  %v85 = vpack.c.b16 %v73, %v72
  %v86 = vpack.c.b16 %v75, %v74
  %v87 = vpack.c.b16 %v77, %v76
  %v88 = vpack.c.b16 %v79, %v78
  %v89 = vpack.c.b16 %v81, %v80
  %98 = vmatpush.bf16.msra.mxu0 %v89
  %99 = vmatpush.bf16.msra.mxu0 %v88
  %100 = vmatpush.bf16.msra.mxu0 %v87
  %101 = vmatpush.bf16.msra.mxu0 %v86
  %102 = vmatpush.bf16.msra.mxu0 %v85
  %103 = vmatpush.bf16.msra.mxu0 %v84
  %104 = vmatpush.bf16.msra.mxu0 %v83
  %105 = vmatpush.bf16.msra.mxu0 %v82
  %106 = vmatmul.bf16.gmra.mxu0 %v48
  %v107 = vpop.f32.mrf.mxu0
  %v108 = vadd.f32 0.0, %v107
  %v109 = vpop.f32.mrf.mxu0
  %v110 = vadd.f32 0.0, %v109
  %111 = vdwg.mxu0
  %v112 = vadd.f32 %v24, %v108
  %v113 = vadd.f32 %v25, %v110
  %vm114 = vcmask 261120
  %115 = vst.msk [vmem:[#allocation2] sm:$0xff] %vm114, %v112
  %116 = vst.msk [vmem:[#allocation2 + $0x8] sm:$0xff] %vm114, %v113
  // Predicated region
  $region22: #{forward.15} parent=0 // pred_check
    %p117 = pneg %p17
  $region23: #{forward.15} parent=0 // pred_check_branch
    %119 = sbr.rel (%p117) target = $region25
  $region24: #{forward.15} parent=0 // pred_region
    %v120 = vld [vmem:[#allocation2] sm:$0xff]
    %v121 = vld [vmem:[#allocation2 + $0x8] sm:$0xff]
    %v122 = vld [vmem:[%s2] sm:$0x1]
    %v124 = vperm.slane %v122, 0
    %v126 = vadd.f32 %v120, %v124
    %v127 = vadd.f32 %v121, %v124
    %v128 = vld [vmem:[%s3] sm:$0xff]
    %v129 = vld [vmem:[%s3 + $0x8] sm:$0xff]
    %v130 = vadd.f32 %v126, %v128
    %v131 = vadd.f32 %v127, %v129
    %132 = vst.msk [vmem:[%s4] sm:$0xff] %vm114, %v130
    %133 = vst.msk [vmem:[%s4 + $0x8] sm:$0xff] %vm114, %v131
  $region25: #{forward.15} parent=0 // pred_fallthru
    _
  // Predicated region
  $region26: #{forward.15} parent=0 // pred_check
    _
  $region27: #{forward.15} parent=0 // pred_check_branch
    %135 = sbr.rel (0) target = $region29
  $region28: #{forward.15} parent=0 // pred_region
    _
  $region29: #{forward.15} parent=0 // pred_fallthru
    _
  // Predicated region
  $region30: #{forward.15} parent=0 // pred_check
    _
  $region31: #{forward.15} parent=0 // pred_check_branch
    %137 = sbr.rel (0) target = $region33
  $region32: #{forward.15} parent=0 // pred_region
    _
  $region33: #{forward.15} parent=0 // pred_fallthru
    _

// kernel: forward.17
$region0: #{forward.17}
  #allocation0 [shape = 'u32[]', space=smem, size = 0x4, offset = 0x4, fixed_abs, tag = 'smem constant byte address 0x4 - core index']
  #allocation1 [shape = 'u32[72,128]{1,0:T(1,128)}', space=vmem, size = 0x9000, scoped, tag = 'internal scratch']
  #allocation2 [shape = 'f32[8,1]{1,0:T(8,128)}', space=vmem, size = 0x1000, scoped, tag = 'scratch operand']
  #allocation3 [shape = 'f32[8,1]{1,0:T(8,128)}', space=vmem, size = 0x1000, scoped, tag = 'scratch operand']
  #allocation4 [shape = 'f32[8,8]{1,0:T(8,128)}', space=vmem, size = 0x1000, scoped, tag = 'scratch operand']
  #allocation5 [shape = 's32[1]{0}', space=sflag, size = 0x4, scoped, tag = 'scoped memory for forward.17']
  #allocation6 [shape = 's32[1]{0:T(128)S(6)}', space=smem, size = 0x200, scoped, tag = 'prefetched SMEM operand 0']
  #allocation7 [shape = 's32[1]{0:T(128)S(6)}', space=smem, size = 0x200, scoped, tag = 'prefetched SMEM operand 1']
  %s0 = inlined_call_operand.<no memory space> [shape: s32[1], index: 0, kind: input, shape index: {}]
  %s1 = inlined_call_operand.<no memory space> [shape: s32[1], index: 1, kind: input, shape index: {}]
  %s2 = inlined_call_operand.vmem [shape: bf16[24,8,8], index: 2, kind: input, shape index: {}, may-alias: {2,3,4}]
  %s3 = inlined_call_operand.vmem [shape: bf16[24,8,8], index: 3, kind: input, shape index: {}, may-alias: {2,3,4}]
  %s4 = inlined_call_operand.vmem [shape: bf16[24,8,8], index: 4, kind: input, shape index: {}, may-alias: {2,3,4}]
  %s5 = inlined_call_operand.vmem [shape: bf16[8,8,8], index: 5, kind: output, shape index: {}]
  %s6 = sld [smem:[#allocation0]]
  $region57: #{forward.17} parent=0
    _
  %s8 = ssub.s32 1, %s6
  %s9 = scalar_select 0, %s8, %s6
  %10 = sst [smem:[#allocation6]] %s0
  %11 = sst [smem:[#allocation7]] %s1
  loop: start=0, step=1, limit=10
  $region2: #{forward.17} parent=0 // loop_pre_header
    _
  $region3: #{forward.17} parent=0 // loop_header
    %s13 = sphi 0, %s17
    %p14 = scmp.ge.s32.totalorder %s13, 10
    %s20 = sphi 0, %s39
    %s21 = sphi 0, %s35
    %s22 = sphi 0, %s31
    %s23 = sphi 0, %s20
    %s24 = sphi 0, %s21
    %s25 = sphi 0, %s22
    %s26 = sphi 0, %s23
    %s27 = sphi 0, %s24
    %s28 = sphi 0, %s25
    %s44 = sphi 0, %s46
    %s47 = sphi 0, %s44
    %s48 = sphi 0, %s47
    %s64 = sphi 0, %s48
    %s78 = sphi 0, %s80
    %s81 = sphi 0, %s78
    %s82 = sphi 0, %s81
    %s98 = sphi 0, %s82
    %s112 = sphi 0, %s114
    %s115 = sphi 0, %s112
    %s116 = sphi 0, %s115
    %s132 = sphi 0, %s116
    %s140 = sphi 0, %s142
    %s143 = sphi 0, %s140
    %s144 = sphi 0, %s143
    %s160 = sphi 0, %s144
  $region4: #{forward.17} parent=0 // loop_header_branch
    %16 = sbr.rel (%p14) target = $region8
  $region5: #{forward.17} parent=0 // loop_body
    %s18 = ssub.s32 %s13, 1
    %s19 = ssub.s32 %s13, 2
    %s29 = sadd.s32 1, %s22
    %p30 = scmp.ge.s32.totalorder %s29, 1
    %s31 = scalar_select %p30, 0, %s29
    %s32 = sadd.s32 1, %s21
    %s33 = scalar_select %p30, %s32, %s21
    %p34 = scmp.ge.s32.totalorder %s33, 1
    %s35 = scalar_select %p34, 0, %s33
    %s36 = sadd.s32 1, %s20
    %s37 = scalar_select %p34, %s36, %s20
    %p38 = scmp.ge.s32.totalorder %s37, 8
    %s39 = scalar_select %p38, 0, %s37
    %s40 = ssub.s32 %s20, %s39
    %s41 = ssub.s32 %s21, %s35
    %s42 = sor.u32 %s40, %s41
    %p43 = scmp.eq.s32.totalorder %s42, 0
    %s45 = sadd.s32 %s44, 1
    %s46 = scalar_select %p43, %s44, %s45
    %p49 = pneg %p43
    %p50 = scmp.eq.s32.totalorder %s13, 7
    %p51 = por %p49, %p50
    %p52 = scmp.ne.s32.totalorder %s44, %s47
    %p53 = scmp.eq.s32.totalorder %s13, 0
    %p54 = por %p52, %p53
    %p55 = scmp.ne.s32.totalorder %s44, %s47
    %p56 = scmp.eq.s32.totalorder %s18, 7
    %p57 = por %p55, %p56
    %p58 = scmp.ne.s32.totalorder %s47, %s48
    %p59 = scmp.eq.s32.totalorder %s18, 0
    %p60 = por %p58, %p59
    %p61 = scmp.ne.s32.totalorder %s47, %s48
    %p62 = scmp.eq.s32.totalorder %s19, 7
    %p63 = por %p61, %p62
    %p65 = scmp.ne.s32.totalorder %s48, %s64
    %p66 = scmp.eq.s32.totalorder %s19, 0
    %p67 = por %p65, %p66
    %s68 = sadd.s32 %s20, 8
    %s69 = sadd.s32 %s21, %s22
    %s70 = sld [smem:[#allocation6 + %s69]]
    %s71 = sadd.s32 %s39, 8
    %s72 = sadd.s32 %s35, %s31
    %s73 = sld [smem:[#allocation6 + %s72]]
    %s74 = ssub.s32 %s68, %s71
    %s75 = ssub.s32 %s70, %s73
    %s76 = sor.u32 %s74, %s75
    %p77 = scmp.eq.s32.totalorder %s76, 0
    %s79 = sadd.s32 %s78, 1
    %s80 = scalar_select %p77, %s78, %s79
    %p83 = pneg %p77
    %p84 = scmp.eq.s32.totalorder %s13, 7
    %p85 = por %p83, %p84
    %p86 = scmp.ne.s32.totalorder %s78, %s81
    %p87 = scmp.eq.s32.totalorder %s13, 0
    %p88 = por %p86, %p87
    %p89 = scmp.ne.s32.totalorder %s78, %s81
    %p90 = scmp.eq.s32.totalorder %s18, 7
    %p91 = por %p89, %p90
    %p92 = scmp.ne.s32.totalorder %s81, %s82
    %p93 = scmp.eq.s32.totalorder %s18, 0
    %p94 = por %p92, %p93
    %p95 = scmp.ne.s32.totalorder %s81, %s82
    %p96 = scmp.eq.s32.totalorder %s19, 7
    %p97 = por %p95, %p96
    %p99 = scmp.ne.s32.totalorder %s82, %s98
    %p100 = scmp.eq.s32.totalorder %s19, 0
    %p101 = por %p99, %p100
    %s102 = sadd.s32 %s20, 16
    %s103 = sadd.s32 %s21, %s22
    %s104 = sld [smem:[#allocation6 + %s103]]
    %s105 = sadd.s32 %s39, 16
    %s106 = sadd.s32 %s35, %s31
    %s107 = sld [smem:[#allocation6 + %s106]]
    %s108 = ssub.s32 %s102, %s105
    %s109 = ssub.s32 %s104, %s107
    %s110 = sor.u32 %s108, %s109
    %p111 = scmp.eq.s32.totalorder %s110, 0
    %s113 = sadd.s32 %s112, 1
    %s114 = scalar_select %p111, %s112, %s113
    %p117 = pneg %p111
    %p118 = scmp.eq.s32.totalorder %s13, 7
    %p119 = por %p117, %p118
    %p120 = scmp.ne.s32.totalorder %s112, %s115
    %p121 = scmp.eq.s32.totalorder %s13, 0
    %p122 = por %p120, %p121
    %p123 = scmp.ne.s32.totalorder %s112, %s115
    %p124 = scmp.eq.s32.totalorder %s18, 7
    %p125 = por %p123, %p124
    %p126 = scmp.ne.s32.totalorder %s115, %s116
    %p127 = scmp.eq.s32.totalorder %s18, 0
    %p128 = por %p126, %p127
    %p129 = scmp.ne.s32.totalorder %s115, %s116
    %p130 = scmp.eq.s32.totalorder %s19, 7
    %p131 = por %p129, %p130
    %p133 = scmp.ne.s32.totalorder %s116, %s132
    %p134 = scmp.eq.s32.totalorder %s19, 0
    %p135 = por %p133, %p134
    %s136 = ssub.s32 %s20, %s39
    %s137 = ssub.s32 %s21, %s35
    %s138 = sor.u32 %s136, %s137
    %p139 = scmp.eq.s32.totalorder %s138, 0
    %s141 = sadd.s32 %s140, 1
    %s142 = scalar_select %p139, %s140, %s141
    %p145 = pneg %p139
    %p146 = scmp.eq.s32.totalorder %s13, 7
    %p147 = por %p145, %p146
    %p148 = scmp.ne.s32.totalorder %s140, %s143
    %p149 = scmp.eq.s32.totalorder %s13, 0
    %p150 = por %p148, %p149
    %p151 = scmp.ne.s32.totalorder %s140, %s143
    %p152 = scmp.eq.s32.totalorder %s18, 7
    %p153 = por %p151, %p152
    %p154 = scmp.ne.s32.totalorder %s143, %s144
    %p155 = scmp.eq.s32.totalorder %s18, 0
    %p156 = por %p154, %p155
    %p157 = scmp.ne.s32.totalorder %s143, %s144
    %p158 = scmp.eq.s32.totalorder %s19, 7
    %p159 = por %p157, %p158
    %p161 = scmp.ne.s32.totalorder %s144, %s160
    %p162 = scmp.eq.s32.totalorder %s19, 0
    %p163 = por %p161, %p162
    %p164 = scmp.le.s32.totalorder 1, %s13
    %p165 = scmp.lt.s32.totalorder %s13, 9
    %p166 = pnand %p164, %p165
    %p167 = pneg %p166
    // Predicated region
    $region9: #{forward.17} parent=5 // pred_check
      _
    $region10: #{forward.17} parent=5 // pred_check_branch
      %169 = sbr.rel (%p166) target = $region12
    $region11: #{forward.17} parent=5 // pred_region
      %s170 = ssub.s32 %s13, 1
    $region12: #{forward.17} parent=5 // pred_fallthru
      _
    %p171 = scmp.lt.s32.totalorder %s13, 8
    // Predicated region
    $region13: #{forward.17} parent=5 // pred_check
      %p172 = pneg %p171
    $region14: #{forward.17} parent=5 // pred_check_branch
      %174 = sbr.rel (%p172) target = $region16
    $region15: #{forward.17} parent=5 // pred_region
      // Predicated region
      $region17: #{forward.17} parent=15 // pred_check
        %p175 = pneg %p54
      $region18: #{forward.17} parent=15 // pred_check_branch
        %177 = sbr.rel (%p175) target = $region20
      $region19: #{forward.17} parent=15 // pred_region
        %p178 = scmp.lt.s32.totalorder %s20, 23
        %s179 = scalar_select %p178, %s20, 23
        %p180 = scmp.lt.s32.totalorder %s21, 0
        %s181 = scalar_select %p180, %s21, 0
        %s182 = sadd.s32 %s181, %s179
        %s183 = smul.addr %s182, 4
        %s184 = scalar_lea.vmem %s2, %s183
      $region20: #{forward.17} parent=15 // pred_fallthru
        _
      // Predicated region
      $region21: #{forward.17} parent=15 // pred_check
        %p185 = pneg %p88
      $region22: #{forward.17} parent=15 // pred_check_branch
        %187 = sbr.rel (%p185) target = $region24
      $region23: #{forward.17} parent=15 // pred_region
        %s188 = sadd.s32 %s20, 8
        %s189 = sadd.s32 %s21, %s22
        %s190 = sld [smem:[#allocation6 + %s189]]
        %p191 = scmp.lt.s32.totalorder %s188, 23
        %s192 = scalar_select %p191, %s188, 23
        %p193 = scmp.lt.s32.totalorder %s190, 0
        %s194 = scalar_select %p193, %s190, 0
        %s195 = sadd.s32 %s194, %s192
        %s196 = smul.addr %s195, 4
        %s197 = scalar_lea.vmem %s3, %s196
        %s198 = sadd.s32 %s20, 8
        %s199 = sadd.s32 %s21, %s22
        %s200 = sld [smem:[#allocation6 + %s199]]
      $region24: #{forward.17} parent=15 // pred_fallthru
        _
      // Predicated region
      $region25: #{forward.17} parent=15 // pred_check
        %p201 = pneg %p122
      $region26: #{forward.17} parent=15 // pred_check_branch
        %203 = sbr.rel (%p201) target = $region28
      $region27: #{forward.17} parent=15 // pred_region
        %s204 = sadd.s32 %s20, 16
        %s205 = sadd.s32 %s21, %s22
        %s206 = sld [smem:[#allocation6 + %s205]]
        %p207 = scmp.lt.s32.totalorder %s204, 23
        %s208 = scalar_select %p207, %s204, 23
        %p209 = scmp.lt.s32.totalorder %s206, 0
        %s210 = scalar_select %p209, %s206, 0
        %s211 = sadd.s32 %s210, %s208
        %s212 = smul.addr %s211, 4
        %s213 = scalar_lea.vmem %s4, %s212
        %s214 = sadd.s32 %s20, 16
        %s215 = sadd.s32 %s21, %s22
        %s216 = sld [smem:[#allocation6 + %s215]]
      $region28: #{forward.17} parent=15 // pred_fallthru
        _
    $region16: #{forward.17} parent=5 // pred_fallthru
      _
    %p217 = scmp.le.s32.totalorder 1, %s13
    %p218 = scmp.lt.s32.totalorder %s13, 9
    %p219 = pnand %p217, %p218
    %p220 = pneg %p219
    // Predicated region
    $region29: #{forward.17} parent=5 // pred_check
      _
    $region30: #{forward.17} parent=5 // pred_check_branch
      %222 = sbr.rel (%p219) target = $region32
    $region31: #{forward.17} parent=5 // pred_region
      %s223 = ssub.s32 %s13, 1
      %p224 = scmp.lt.s32.totalorder %s23, 23
      %s225 = scalar_select %p224, %s23, 23
      %p226 = scmp.lt.s32.totalorder %s24, 0
      %s227 = scalar_select %p226, %s24, 0
      %s228 = sadd.s32 %s227, %s225
      %s229 = smul.addr %s228, 4
      %s230 = scalar_lea.vmem %s2, %s229
      %p231 = pneg %p60
      %p232 = pneg %p57
      %s233 = sadd.s32 %s23, 8
      %s234 = sadd.s32 %s24, %s25
      %s235 = sld [smem:[#allocation6 + %s234]]
      %p236 = scmp.lt.s32.totalorder %s233, 23
      %s237 = scalar_select %p236, %s233, 23
      %p238 = scmp.lt.s32.totalorder %s235, 0
      %s239 = scalar_select %p238, %s235, 0
      %s240 = sadd.s32 %s239, %s237
      %s241 = smul.addr %s240, 4
      %s242 = scalar_lea.vmem %s3, %s241
      %p243 = pneg %p94
      %p244 = pneg %p91
      %s245 = sadd.s32 %s23, 16
      %s246 = sadd.s32 %s24, %s25
      %s247 = sld [smem:[#allocation6 + %s246]]
      %p248 = scmp.lt.s32.totalorder %s245, 23
      %s249 = scalar_select %p248, %s245, 23
      %p250 = scmp.lt.s32.totalorder %s247, 0
      %s251 = scalar_select %p250, %s247, 0
      %s252 = sadd.s32 %s251, %s249
      %s253 = smul.addr %s252, 4
      %s254 = scalar_lea.vmem %s4, %s253
      %p255 = pneg %p128
      %p256 = pneg %p125
      %p257 = pneg %p156
      %p258 = pneg %p153
      %p259 = scmp.lt.s32.totalorder %s23, 7
      %s260 = scalar_select %p259, %s23, 7
      %p261 = scmp.lt.s32.totalorder %s24, 0
      %s262 = scalar_select %p261, %s24, 0
      %s263 = sadd.s32 %s262, %s260
      %s264 = smul.addr %s263, 4
      %s265 = scalar_lea.vmem %s5, %s264
      %p266 = scmp.lt.s32.totalorder %s23, 23
      %s267 = scalar_select %p266, %s23, 23
      %p268 = scmp.lt.s32.totalorder %s24, 0
      %s269 = scalar_select %p268, %s24, 0
      %s270 = sadd.s32 %s269, %s267
      %s271 = smul.addr %s270, 4
      %s272 = scalar_lea.vmem %s2, %s271
      %s273 = sadd.s32 %s23, 8
      %s274 = sadd.s32 %s24, %s25
      %s275 = sld [smem:[#allocation6 + %s274]]
      %p276 = scmp.lt.s32.totalorder %s273, 23
      %s277 = scalar_select %p276, %s273, 23
      %p278 = scmp.lt.s32.totalorder %s275, 0
      %s279 = scalar_select %p278, %s275, 0
      %s280 = sadd.s32 %s279, %s277
      %s281 = smul.addr %s280, 4
      %s282 = scalar_lea.vmem %s3, %s281
      %s283 = sadd.s32 %s23, 8
      %s284 = sadd.s32 %s24, %s25
      %s285 = sld [smem:[#allocation6 + %s284]]
      %s286 = sadd.s32 %s23, 16
      %s287 = sadd.s32 %s24, %s25
      %s288 = sld [smem:[#allocation6 + %s287]]
      %p289 = scmp.lt.s32.totalorder %s286, 23
      %s290 = scalar_select %p289, %s286, 23
      %p291 = scmp.lt.s32.totalorder %s288, 0
      %s292 = scalar_select %p291, %s288, 0
      %s293 = sadd.s32 %s292, %s290
      %s294 = smul.addr %s293, 4
      %s295 = scalar_lea.vmem %s4, %s294
      %s296 = sadd.s32 %s23, 16
      %s297 = sadd.s32 %s24, %s25
      %s298 = sld [smem:[#allocation6 + %s297]]
      %p299 = scmp.lt.s32.totalorder %s23, 7
      %s300 = scalar_select %p299, %s23, 7
      %p301 = scmp.lt.s32.totalorder %s24, 0
      %s302 = scalar_select %p301, %s24, 0
      %s303 = sadd.s32 %s302, %s300
      %s304 = smul.addr %s303, 4
      %s305 = scalar_lea.vmem %s5, %s304
      %s307 = sld [smem:[#allocation7 + %s24]]
      %p308 = scmp.eq.s32.totalorder %s25, 0
      // Predicated region
      $region33: #{forward.17} parent=31 // pred_check
        %p309 = pneg %p308
      $region34: #{forward.17} parent=31 // pred_check_branch
        %311 = sbr.rel (%p309) target = $region36
      $region35: #{forward.17} parent=31 // pred_region
        %vm312 = vcmask 7168
        %313 = vst.msk [vmem:[#allocation2] sm:$0xff] %vm312, -1e+30
        %314 = vst.msk [vmem:[#allocation3] sm:$0xff] %vm312, 0.0
        %vm315 = vcmask 64512
        %316 = vst.msk [vmem:[#allocation4] sm:$0xff] %vm315, 0.0
      $region36: #{forward.17} parent=31 // pred_fallthru
        _
      %p317 = scmp.lt.s32.totalorder %s25, %s307
      // Predicated region
      $region37: #{forward.17} parent=31 // pred_check
        %p318 = pneg %p317
      $region38: #{forward.17} parent=31 // pred_check_branch
        %320 = sbr.rel (%p318) target = $region40
      $region39: #{forward.17} parent=31 // pred_region
        %s321 = sadd.s32 %s24, %s25
        %s322 = sld [smem:[#allocation6 + %s321]]
        %v323 = vld [vmem:[%s272] sm:$0xf]
        %v324 = vld [vmem:[%s282] sm:$0xf]
        %vm325 = vcmask 64512
        %v327 = vsel %vm325, %v323, 0
        %v330 = vsel %vm325, %v324, 0
        %332 = vmatpush.bf16.xpose.msra.mxu0 0
        %333 = vmatpush.bf16.xpose.msra.mxu0 0
        %334 = vmatpush.bf16.xpose.msra.mxu0 0
        %335 = vmatpush.bf16.xpose.msra.mxu0 0
        %336 = vmatpush.bf16.xpose.msra.mxu0 0
        %337 = vmatpush.bf16.xpose.msra.mxu0 0
        %338 = vmatpush.bf16.xpose.msra.mxu0 0
        %339 = vmatpush.bf16.xpose.msra.mxu0 %v330
        %340 = vmatmul.bf16.gmra.mxu0 %v327
        %v341 = vpop.f32.mrf.mxu0
        %v342 = vadd.f32 0.0, %v341
        %v343 = vpop.f32.mrf.mxu0
        %344 = vdwg.mxu0
        %s345 = smul.u32 %s24, 8
        %v346 = vlaneseq
        %v347 = vshrl.u32 %v346, 7
        %v348 = vstv %s345
        %v349 = vadd.s32 %v348, %v347
        %s350 = smul.u32 %s322, 8
        %v351 = vlaneseq
        %v352 = vand.u32 %v351, 127
        %v353 = vstv %s350
        %v354 = vadd.s32 %v353, %v352
        %v355 = vsub.s32 %v349, %v354
        %vm356 = vcmp.eq.s32.totalorder %v355, 0
        %vm357 = vcmp.gt.s32.totalorder %v355, 0
        %v358 = vsub.s32 %v355, 1
        %v359 = vand.u32 %v355, %v358
        %vm360 = vcmp.eq.s32.totalorder %v359, 0
        %vm361 = vmand %vm357, %vm360
        %vm362 = vmor %vm356, %vm361
        %v363 = vsel %vm362, %v342, -1e+30
        %v364 = vld [vmem:[%s295] sm:$0xf]
        %v365 = vld [vmem:[#allocation2] sm:$0xff]
        %v366 = vsel %vm325, %v363, -inf
        %367 = vmax.xlane.f32.xlu0 %v366
        %v368 = vpop.xlane.xlu0 %367
        %v369 = vmax.f32 %v365, %v368
        %v370 = vsub.f32 %v365, %v369
        %v371 = vmul.f32 %v370, 1.442695
        %v372 = vpow.pop %v371
        %374 = vset.pattern.permute.xlu0 0
        %375 = vperm.xlu0 %374, %v369
        %v376 = vpop.permute.xlu0 %375
        %v378 = vsub.f32 %v363, %v376
        %v379 = vmul.f32 %v378, 1.442695
        %v380 = vpow.pop %v379
        %v381 = vld [vmem:[#allocation3] sm:$0xff]
        %v382 = vmul.f32 %v372, %v381
        %v383 = vsel %vm325, %v380, 0.0
        %384 = vadd.xlane.f32.xlu0 %v383
        %v385 = vpop.xlane.xlu0 %384
        %v386 = vadd.f32 %v382, %v385
        %vm387 = vcmask 7168
        %388 = vst.msk [vmem:[#allocation3] sm:$0xff] %vm387, %v386
        %v389 = vld [vmem:[#allocation4] sm:$0xff]
        %391 = vset.pattern.permute.xlu0 0
        %392 = vperm.xlu0 %391, %v372
        %v393 = vpop.permute.xlu0 %392
        %v395 = vmul.f32 %v393, %v389
        %v396 = vpack.c.bf16 %v380, %v380
        %v398 = vsel %vm325, %v396, 0
        %vm400 = vcmask 1043456
        %v402 = vsel %vm400, %v364, 0
        %404 = vmatpush.bf16.msra.mxu0 0
        %405 = vmatpush.bf16.msra.mxu0 0
        %406 = vmatpush.bf16.msra.mxu0 0
        %407 = vmatpush.bf16.msra.mxu0 0
        %408 = vmatpush.bf16.msra.mxu0 0
        %409 = vmatpush.bf16.msra.mxu0 0
        %410 = vmatpush.bf16.msra.mxu0 0
        %411 = vmatpush.bf16.msra.mxu0 %v402
        %412 = vmatmul.bf16.gmra.mxu0 %v398
        %v413 = vpop.f32.mrf.mxu0
        %v414 = vadd.f32 0.0, %v413
        %v415 = vpop.f32.mrf.mxu0
        %416 = vdwg.mxu0
        %v417 = vadd.f32 %v395, %v414
        %418 = vst.msk [vmem:[#allocation4] sm:$0xff] %vm325, %v417
        %419 = vst.msk [vmem:[#allocation2] sm:$0xff] %vm387, %v369
      $region40: #{forward.17} parent=31 // pred_fallthru
        _
      %s420 = ssub.s32 %s307, 1
      %p421 = scmp.eq.s32.totalorder %s25, %s420
      // Predicated region
      $region41: #{forward.17} parent=31 // pred_check
        %p422 = pneg %p421
      $region42: #{forward.17} parent=31 // pred_check_branch
        %424 = sbr.rel (%p422) target = $region44
      $region43: #{forward.17} parent=31 // pred_region
        %v425 = vld [vmem:[#allocation4] sm:$0xff]
        %v426 = vld [vmem:[#allocation3] sm:$0xff]
        %v427 = vrcp.pop %v426
        %429 = vset.pattern.permute.xlu0 0
        %430 = vperm.xlu0 %429, %v427
        %v431 = vpop.permute.xlu0 %430
        %v433 = vmul.f32 %v425, %v431
        %v434 = vpack.c.bf16 %v433, %v433
        %vm435 = vcmask 60416
        %436 = vst.msk [vmem:[%s305] sm:$0xf] %vm435, %v434
      $region44: #{forward.17} parent=31 // pred_fallthru
        _
      %p437 = scmp.lt.s32.totalorder %s23, 7
      %s438 = scalar_select %p437, %s23, 7
      %p439 = scmp.lt.s32.totalorder %s24, 0
      %s440 = scalar_select %p439, %s24, 0
      %s441 = sadd.s32 %s440, %s438
      %s442 = smul.addr %s441, 4
      %s443 = scalar_lea.vmem %s5, %s442
      // Predicated region
      $region45: #{forward.17} parent=31 // pred_check
        %p444 = pneg %p153
      $region46: #{forward.17} parent=31 // pred_check_branch
        %446 = sbr.rel (%p444) target = $region48
      $region47: #{forward.17} parent=31 // pred_region
        _
      $region48: #{forward.17} parent=31 // pred_fallthru
        _
    $region32: #{forward.17} parent=5 // pred_fallthru
      _
    %p447 = scmp.le.s32.totalorder 2, %s13
    // Predicated region
    $region49: #{forward.17} parent=5 // pred_check
      %p448 = pneg %p447
    $region50: #{forward.17} parent=5 // pred_check_branch
      %450 = sbr.rel (%p448) target = $region52
    $region51: #{forward.17} parent=5 // pred_region
      %s451 = ssub.s32 %s13, 2
      // Predicated region
      $region53: #{forward.17} parent=51 // pred_check
        %p452 = pneg %p159
      $region54: #{forward.17} parent=51 // pred_check_branch
        %454 = sbr.rel (%p452) target = $region56
      $region55: #{forward.17} parent=51 // pred_region
        %p455 = scmp.lt.s32.totalorder %s26, 7
        %s456 = scalar_select %p455, %s26, 7
        %p457 = scmp.lt.s32.totalorder %s27, 0
        %s458 = scalar_select %p457, %s27, 0
        %s459 = sadd.s32 %s458, %s456
        %s460 = smul.addr %s459, 4
        %s461 = scalar_lea.vmem %s5, %s460
      $region56: #{forward.17} parent=51 // pred_fallthru
        _
    $region52: #{forward.17} parent=5 // pred_fallthru
      _
  $region6: #{forward.17} parent=0 // loop_footer
    %s17 = sadd.s32 1, %s13
  $region7: #{forward.17} parent=0 // loop_footer_branch
    %12 = sbr.rel target = $region3
  $region8: #{forward.17} parent=0 // loop_exit
    _

</llo_original>
